<compile_context>
chip_gen: v5e
topology: v5e:2x2
jax: 0.10.0
libtpu: 0.0.40
codegen_flags: <defaults>
</compile_context>

<pallas_src>
import functools

import numpy as np
import jax
import jax.numpy as jnp
from jax import lax
from jax.experimental import pallas as pl
from jax.experimental.pallas import tpu as pltpu


def _round_up(v, m):
    return (v + m - 1) // m * m


# ----------------------------------------------------------------------------
# Kernel 1: RoI max pooling (channels-last, separable masked-max per bin)
# ----------------------------------------------------------------------------
def _roi_pool_kernel(bidx_ref, hs_ref, he_ref, ws_ref, we_ref,   # SMEM scalar prefetch (1-D)
                     feat_ref,                                   # (1, H, W, C) VMEM
                     out_ref,                                    # (1, rs*rs, C) VMEM (bf16)
                     *, pooled, H, W):
    r = pl.program_id(0)
    feat = feat_ref[0]                                           # (H, W, C), C on the lane axis
    # Sentinel for masked-out elements.  Pooling math stays in f32 (only the
    # final store is bf16), so a genuine activation below -1e37 is impossible
    # for CNN features; documented on purpose.
    neg = jnp.float32(-3.0e38)

    w_idx = lax.broadcasted_iota(jnp.int32, (1, W, 1), 1)
    h_idx = lax.broadcasted_iota(jnp.int32, (H, 1), 0)

    # Separable masked max.  Only ONE (H, C) column max is live at a time
    # (no (pooled, H, C) colstack -> no vreg spill), and each (pooled, C)
    # slab is stored directly into the lane-dense output block.
    # Output row index convention: pw * pooled + ph  (Wc rows are permuted
    # once at prepare time to match).
    # TODO(synk): window the W-pass with a pl.ds dynamic-start slice
    # (pl.multiple_of-aligned) instead of masking the full W for every bin.
    for pw in range(pooled):
        w0 = ws_ref[r * pooled + pw]
        w1 = we_ref[r * pooled + pw]
        mw = (w_idx >= w0) & (w_idx < w1)                         # (1, W, 1)
        col = jnp.max(jnp.where(mw, feat, neg), axis=1)           # (H, C)
        rows = []
        for ph in range(pooled):
            h0 = hs_ref[r * pooled + ph]
            h1 = he_ref[r * pooled + ph]
            mh = (h_idx >= h0) & (h_idx < h1)                     # (H, 1)
            v = jnp.max(jnp.where(mh, col, neg), axis=0, keepdims=True)   # (1, C)
            v = jnp.where(v < jnp.float32(-1.0e37), jnp.float32(0.0), v)  # empty bin -> 0
            rows.append(v)
        out_ref[0, pw * pooled:(pw + 1) * pooled, :] = (
            jnp.concatenate(rows, axis=0).astype(out_ref.dtype))


def _roi_bins(boxes, pooled, spatial_scale, H, W):
    """Integer bin boundaries (torchvision roi_pool convention). Pure glue."""
    bidx = boxes[:, 0].astype(jnp.int32)
    x1 = jnp.round(boxes[:, 1] * spatial_scale).astype(jnp.int32)
    y1 = jnp.round(boxes[:, 2] * spatial_scale).astype(jnp.int32)
    x2 = jnp.round(boxes[:, 3] * spatial_scale).astype(jnp.int32)
    y2 = jnp.round(boxes[:, 4] * spatial_scale).astype(jnp.int32)
    roi_w = jnp.maximum(x2 - x1 + 1, 1).astype(jnp.float32)
    roi_h = jnp.maximum(y2 - y1 + 1, 1).astype(jnp.float32)
    bin_h = roi_h / pooled
    bin_w = roi_w / pooled
    p = jnp.arange(pooled, dtype=jnp.float32)
    hs = jnp.clip(jnp.floor(p[None, :] * bin_h[:, None]).astype(jnp.int32) + y1[:, None], 0, H)
    he = jnp.clip(jnp.ceil((p[None, :] + 1.0) * bin_h[:, None]).astype(jnp.int32) + y1[:, None], 0, H)
    ws = jnp.clip(jnp.floor(p[None, :] * bin_w[:, None]).astype(jnp.int32) + x1[:, None], 0, W)
    we = jnp.clip(jnp.ceil((p[None, :] + 1.0) * bin_w[:, None]).astype(jnp.int32) + x1[:, None], 0, W)
    return bidx, hs, he, ws, we


def roi_pool(feat_nchw, boxes, pooled, spatial_scale, out_dtype=jnp.bfloat16):
    """feat: (N, C, H, W) f32; boxes: (R, 5) f32 -> (R, pooled*pooled, C),
    row index = pw*pooled + ph (lane-dense; matches the permuted Wc)."""
    N, C, H, W = feat_nchw.shape
    R = boxes.shape[0]

    # Sort ROIs by batch index so consecutive grid steps keep the same feature
    # block index -> Pallas skips the (H, W, C) slab DMA (HBM traffic ~N slabs
    # instead of ~R slabs).  Output is un-permuted afterwards.
    order = jnp.argsort(boxes[:, 0].astype(jnp.int32))
    inv_order = jnp.argsort(order)
    boxes_s = boxes[order]

    bidx, hs, he, ws, we = _roi_bins(boxes_s, pooled, spatial_scale, H, W)
    # Flatten bin tables to 1-D so SMEM does not pad them to (ceil(R/8)*8, 128).
    hs, he, ws, we = hs.reshape(-1), he.reshape(-1), ws.reshape(-1), we.reshape(-1)

    # Channels-last so C (a multiple of 128 in real models) is the lane axis.
    feat = jnp.transpose(feat_nchw, (0, 2, 3, 1))                 # (N, H, W, C)

    # Tight VMEM estimate: double-buffered slab + one fused-select temp +
    # double-buffered (tiny) output + margin.  Floored at the default scoped
    # limit, capped below v7x's 64 MiB physical VMEM.
    # TODO(synk): add an H-striped grid axis for FPN-sized maps that do not
    # fit a single (H, W, C) slab in v7x's 64 MiB VMEM.
    slab = H * W * C * 4
    vmem_est = int(3 * slab + 2 * pooled * pooled * C * 2 + (4 << 20))
    vmem_est = min(max(vmem_est, 32 << 20), 60 << 20)

    out = pl.pallas_call(
        functools.partial(_roi_pool_kernel, pooled=pooled, H=H, W=W),
        out_shape=jax.ShapeDtypeStruct((R, pooled * pooled, C), out_dtype),
        grid_spec=pltpu.PrefetchScalarGridSpec(
            num_scalar_prefetch=5,
            grid=(R,),
            in_specs=[
                pl.BlockSpec((1, H, W, C),
                             lambda r, b, *_: (b[r], 0, 0, 0)),   # data-dependent batch gather
            ],
            out_specs=pl.BlockSpec((1, pooled * pooled, C), lambda r, *_: (r, 0, 0)),
        ),
        compiler_params=pltpu.CompilerParams(
            dimension_semantics=("parallel",),
            vmem_limit_bytes=vmem_est),
    )(bidx, hs, he, ws, we, feat)

    return out[inv_order]                                         # undo the batch sort


# ----------------------------------------------------------------------------
# Kernel 2: fused classifier (Linear + ReLU) + fused fc_cls|fc_loc head
# ----------------------------------------------------------------------------
def _fc_heads_kernel(x_ref, wc_ref, bc_ref, wh_ref, bh_ref, out_ref, fc_acc):
    h = pl.program_id(1)
    f = pl.program_id(2)

    @pl.when(f == 0)
    def _():
        fc_acc[...] = jnp.zeros_like(fc_acc)

    # classifier partial contraction: acc += x[:, f-tile] @ Wc[f-tile, h-tile]
    fc_acc[...] += jnp.dot(x_ref[...], wc_ref[...], preferred_element_type=jnp.float32)

    @pl.when(f == pl.num_programs(2) - 1)
    def _():
        fc = jnp.maximum(fc_acc[...] + bc_ref[...], 0.0).astype(wh_ref.dtype)  # bf16 for MXU
        head = jnp.dot(fc, wh_ref[...], preferred_element_type=jnp.float32)

        @pl.when(h == 0)
        def _():
            out_ref[...] = jnp.broadcast_to(bh_ref[...], out_ref.shape)

        out_ref[...] += head


# ----------------------------------------------------------------------------
# One-time weight preparation (hoisted out of the per-call forward)
# ----------------------------------------------------------------------------
def prepare_roi_head_params(params, *, n_class, roisize, channels,
                            tile_f_cap=2048, tile_h_cap=2048):
    """Permute / pad / fuse / bf16-cast the weights ONCE.

    - Wc rows are permuted from PyTorch's channel-major `.view(R, -1)` order
      (c*rs*rs + ph*rs + pw) to the roi_pool kernel's (pw*rs + ph)*C + c
      order, so the pooled output flattens into x with zero relayout.
    - F and Hd are padded to tile multiples (no silently dropped hidden units).
    - cls|loc heads fused and lane-padded to 128 (single unmasked store).
    """
    Wc, bc = params["Wc"], params["bc"]          # (F, Hd), (Hd,)
    Ws, bs = params["Ws"], params["bs"]          # (Hd, n_class)
    Wl, bl = params["Wl"], params["bl"]          # (Hd, 4*n_class)
    F, Hd = Wc.shape
    rs, C = roisize, channels
    assert F == C * rs * rs, "classifier in_features must equal C*rs*rs"

    pw, ph, c = np.unravel_index(np.arange(F), (rs, rs, C))
    old_rows = jnp.asarray(c * rs * rs + ph * rs + pw, dtype=jnp.int32)
    Wc = Wc[old_rows, :]

    tile_f = min(tile_f_cap, _round_up(F, 128))
    tile_h = min(tile_h_cap, _round_up(Hd, 128))
    F_pad = _round_up(F, tile_f)
    Hd_pad = _round_up(Hd, tile_h)

    n_head = 5 * n_class
    HEADp = _round_up(n_head, 128)
    Wh = jnp.pad(jnp.concatenate([Ws, Wl], axis=1),
                 ((0, Hd_pad - Hd), (0, HEADp - n_head)))
    bh = jnp.pad(jnp.concatenate([bs, bl], axis=0), (0, HEADp - n_head))

    Wc = jnp.pad(Wc, ((0, F_pad - F), (0, Hd_pad - Hd)))
    bc = jnp.pad(bc, (0, Hd_pad - Hd))

    # bf16 MXU operands (halves weight DMA bytes); f32 accumulation in-kernel.
    # TODO(synk): optional int8 Wc path for v5e (int8 MXU); not portable to v7x.
    return dict(
        Wc=Wc.astype(jnp.bfloat16),
        bc=bc.reshape(1, -1).astype(jnp.float32),
        Wh=Wh.astype(jnp.bfloat16),
        bh=bh.reshape(1, -1).astype(jnp.float32),
        tile_f=tile_f, tile_h=tile_h, F=F, F_pad=F_pad, Hd_pad=Hd_pad,
        n_class=n_class, n_head=n_head, HEADp=HEADp,
        roisize=rs, channels=C)


def roi_head_forward(feat, boxes, prepared, *, spatial_scale):
    # TODO(synk): fuse roi_pool output directly into the FC kernel
    # (emit_pipeline over F tiles) to avoid the HBM round-trip of x.
    rs = prepared["roisize"]
    pooled = roi_pool(feat, boxes, rs, spatial_scale)             # (R, rs*rs, C) bf16
    R = pooled.shape[0]
    x = pooled.reshape(R, -1)                                     # (pw,ph,C)-major flattening
    F = prepared["F"]
    assert x.shape[1] == F

    tile_f, tile_h = prepared["tile_f"], prepared["tile_h"]
    F_pad, Hd_pad, HEADp = prepared["F_pad"], prepared["Hd_pad"], prepared["HEADp"]

    # ROI rows: 16-step for bf16 sublane packing, up to 256 to fill the MXU.
    # TODO(synk): batch ROIs across images so R >= 256; on v7x ensure >= 2
    # blocks on the parallel axis so both TensorCores get FC work.
    tile_r = min(256, _round_up(max(R, 16), 16))
    R_pad = _round_up(R, tile_r)
    x_p = jnp.pad(x, ((0, R_pad - R), (0, F_pad - F)))            # stays bf16

    grid = (R_pad // tile_r, Hd_pad // tile_h, F_pad // tile_f)   # contraction (F) last

    flops = 2 * R_pad * F_pad * Hd_pad + 2 * R_pad * Hd_pad * HEADp
    bytes_accessed = (R_pad * F_pad * 2 + F_pad * Hd_pad * 2 + Hd_pad * 4
                      + Hd_pad * HEADp * 2 + HEADp * 4 + R_pad * HEADp * 4)

    vmem_est = int(
        2 * (tile_r * tile_f * 2 + tile_f * tile_h * 2 + tile_h * 4
             + tile_h * HEADp * 2 + HEADp * 4 + tile_r * HEADp * 4)
        + tile_r * tile_h * 4 + (4 << 20))
    vmem_est = min(max(vmem_est, 32 << 20), 60 << 20)             # inside v7x 64 MiB physical

    out = pl.pallas_call(
        _fc_heads_kernel,
        out_shape=jax.ShapeDtypeStruct((R_pad, HEADp), jnp.float32),
        grid_spec=pltpu.PrefetchScalarGridSpec(
            num_scalar_prefetch=0,
            grid=grid,
            in_specs=[
                pl.BlockSpec((tile_r, tile_f), lambda i, h, f: (i, f)),
                pl.BlockSpec((tile_f, tile_h), lambda i, h, f: (f, h)),
                pl.BlockSpec((1, tile_h), lambda i, h, f: (0, h)),
                pl.BlockSpec((tile_h, HEADp), lambda i, h, f: (h, 0)),
                pl.BlockSpec((1, HEADp), lambda i, h, f: (0, 0)),
            ],
            out_specs=pl.BlockSpec((tile_r, HEADp), lambda i, h, f: (i, 0)),
            scratch_shapes=[pltpu.VMEM((tile_r, tile_h), jnp.float32)],
        ),
        compiler_params=pltpu.CompilerParams(
            dimension_semantics=("parallel", "arbitrary", "arbitrary"),
            vmem_limit_bytes=vmem_est),
        cost_estimate=pl.CostEstimate(flops=int(flops), transcendentals=0,
                                      bytes_accessed=int(bytes_accessed)),
    )(x_p, prepared["Wc"], prepared["bc"], prepared["Wh"], prepared["bh"])

    n_class, n_head = prepared["n_class"], prepared["n_head"]
    score = out[:R, :n_class]
    loc = out[:R, n_class:n_head]
    return score, loc


# ----------------------------------------------------------------------------
# Deterministic parameter init (weights stored transposed: (in, out))
# ----------------------------------------------------------------------------
def init_params(key, in_features, hidden, n_class):
    k1, k2, k3, k4 = jax.random.split(key, 4)
    Wc = jax.random.normal(k1, (in_features, hidden), jnp.float32) * 0.02   # classifier Linear
    bc = jax.random.normal(k2, (hidden,), jnp.float32) * 0.02
    Ws = jax.random.normal(k3, (hidden, n_class), jnp.float32) * 0.01       # fc_cls
    bs = jnp.zeros((n_class,), jnp.float32)
    Wl = jax.random.normal(k4, (hidden, 4 * n_class), jnp.float32) * 0.001  # fc_loc
    bl = jnp.zeros((4 * n_class,), jnp.float32)
    return dict(Wc=Wc, bc=bc, Ws=Ws, bs=bs, Wl=Wl, bl=bl)


# ----------------------------------------------------------------------------
# NumPy reference (for correctness check)
# ----------------------------------------------------------------------------
def roi_pool_numpy(feat, bidx, hs, he, ws, we, pooled):
    feat = np.asarray(feat)
    R = bidx.shape[0]
    C = feat.shape[1]
    out = np.zeros((R, C, pooled, pooled), np.float32)
    for r in range(R):
        for ph in range(pooled):
            for pw in range(pooled):
                h0, h1 = int(hs[r, ph]), int(he[r, ph])
                w0, w1 = int(ws[r, pw]), int(we[r, pw])
                if h1 > h0 and w1 > w0:
                    out[r, :, ph, pw] = feat[int(bidx[r]), :, h0:h1, w0:w1].max(axis=(1, 2))
    return out


if __name__ == "__main__":
    key = jax.random.PRNGKey(0)
    kf, kb1, kb2, kb3, kp = jax.random.split(key, 5)

    N, C, H, W = 2, 8, 16, 16
    R = 8
    n_class = 8
    roisize = 4
    spatial_scale = 0.5                 # feature stride 2 -> boxes in 32x32 image coords
    hidden = 4096                       # matches nn.Linear(4096, ...) in the module

    feat = jax.random.normal(kf, (N, C, H, W), jnp.float32)

    img = int(round(W / spatial_scale))  # 32
    bidx = (jnp.arange(R) % N).astype(jnp.float32)   # interleaved 0,1,0,1 -> exercises batch sort
    x1 = jax.random.randint(kb1, (R,), 0, img - 8).astype(jnp.float32)
    y1 = jax.random.randint(kb2, (R,), 0, img - 8).astype(jnp.float32)
    wh = jax.random.randint(kb3, (R, 2), 4, 14).astype(jnp.float32)
    x2 = jnp.minimum(x1 + wh[:, 0], float(img - 1))
    y2 = jnp.minimum(y1 + wh[:, 1], float(img - 1))
    roi_boxes = jnp.stack([bidx, x1, y1, x2, y2], axis=1)   # (R, 5)

    params = init_params(kp, C * roisize * roisize, hidden, n_class)
    prepared = prepare_roi_head_params(params, n_class=n_class,
                                       roisize=roisize, channels=C)

    score, loc = roi_head_forward(feat, roi_boxes, prepared,
                                  spatial_scale=spatial_scale)
    jax.block_until_ready((score, loc))
    assert score.shape == (R, n_class) and loc.shape == (R, 4 * n_class)

    # ---- correctness check against a plain NumPy reference ----
    b_i, hs_i, he_i, ws_i, we_i = _roi_bins(roi_boxes, roisize, spatial_scale, H, W)
    pooled_ref = roi_pool_numpy(feat, np.asarray(b_i), np.asarray(hs_i),
                                np.asarray(he_i), np.asarray(ws_i), np.asarray(we_i), roisize)

    # Kernel output is (R, pw*rs+ph, C) bf16; reference is (R, C, ph, pw) f32.
    pooled_pl = np.asarray(roi_pool(feat, roi_boxes, roisize, spatial_scale)).astype(np.float32)
    ref_pwphC = pooled_ref.transpose(0, 3, 2, 1).reshape(R, roisize * roisize, C)
    assert np.allclose(pooled_pl, ref_pwphC, rtol=2e-2, atol=2e-2)

    # FC reference in the ORIGINAL channel-major layout with the ORIGINAL Wc
    # (permuted-x @ permuted-Wc == original-x @ original-Wc).
    x_ref = pooled_ref.reshape(R, -1)
    fc_ref = np.maximum(x_ref @ np.asarray(params["Wc"]) + np.asarray(params["bc"]), 0.0)
    score_ref = fc_ref @ np.asarray(params["Ws"]) + np.asarray(params["bs"])
    loc_ref = fc_ref @ np.asarray(params["Wl"]) + np.asarray(params["bl"])
    # tolerances account for bf16 MXU operands / bf16-stored pooled activations
    assert np.allclose(np.asarray(score), score_ref, rtol=5e-2, atol=3e-2)
    assert np.allclose(np.asarray(loc), loc_ref, rtol=5e-2, atol=3e-2)

    print("KERNEL_OK")
</pallas_src>

<mosaic_0001>
module attributes {stable_mosaic.version = 11 : i64} {
  func.func @_roi_pool_kernel(%arg0: i32, %arg1: memref<8xi32, #tpu.memory_space<smem>>, %arg2: memref<32xi32, #tpu.memory_space<smem>>, %arg3: memref<32xi32, #tpu.memory_space<smem>>, %arg4: memref<32xi32, #tpu.memory_space<smem>>, %arg5: memref<32xi32, #tpu.memory_space<smem>>, %arg6: memref<1x16x16x8xf32, #tpu.memory_space<vmem>>, %arg7: memref<1x16x8xbf16, #tpu.memory_space<vmem>>) attributes {dimension_semantics = [#tpu.dimension_semantics<parallel>], iteration_bounds = array<i64: 8>, scalar_prefetch = 5 : i64, scratch_operands = 0 : i64, tpu.core_type = #tpu.core_type<tc>, window_params = [{transform_indices = @transform_0, window_bounds = array<i64: 1, 16, 16, 8>}, {transform_indices = @transform_1, window_bounds = array<i64: 1, 16, 8>}]} {
    %c0 = arith.constant 0 : index
    %c0_0 = arith.constant 0 : index
    %c0_1 = arith.constant 0 : index
    %c0_2 = arith.constant 0 : index
    %0 = vector.load %arg6[%c0, %c0_0, %c0_1, %c0_2] : memref<1x16x16x8xf32, #tpu.memory_space<vmem>>, vector<1x16x16x8xf32>
    %1 = vector.shape_cast %0 : vector<1x16x16x8xf32> to vector<16x16x8xf32>
    %2 = tpu.iota {dimensions = array<i32: 1>} : vector<1x16x1xi32>
    %3 = tpu.iota {dimensions = array<i32: 0>} : vector<16x1xi32>
    %c4_i32 = arith.constant 4 : i32
    %4 = arith.muli %arg0, %c4_i32 : i32
    %c0_i32 = arith.constant 0 : i32
    %5 = arith.addi %4, %c0_i32 : i32
    %6 = arith.index_cast %5 : i32 to index
    %7 = memref.load %arg4[%6] : memref<32xi32, #tpu.memory_space<smem>>
    %c4_i32_3 = arith.constant 4 : i32
    %8 = arith.muli %arg0, %c4_i32_3 : i32
    %c0_i32_4 = arith.constant 0 : i32
    %9 = arith.addi %8, %c0_i32_4 : i32
    %10 = arith.index_cast %9 : i32 to index
    %11 = memref.load %arg5[%10] : memref<32xi32, #tpu.memory_space<smem>>
    %12 = vector.broadcast %7 : i32 to vector<1x16x1xi32>
    %13 = arith.cmpi sge, %2, %12 : vector<1x16x1xi32>
    %14 = vector.broadcast %11 : i32 to vector<1x16x1xi32>
    %15 = arith.cmpi slt, %2, %14 : vector<1x16x1xi32>
    %16 = arith.andi %13, %15 : vector<1x16x1xi1>
    %cst = arith.constant -3.000000e+38 : f32
    %17 = vector.shape_cast %16 : vector<1x16x1xi1> to vector<1x16x1xi1>
    %18 = vector.broadcast %17 : vector<1x16x1xi1> to vector<16x16x8xi1>
    %19 = vector.broadcast %cst : f32 to vector<16x16x8xf32>
    %20 = arith.select %18, %1, %19 : vector<16x16x8xi1>, vector<16x16x8xf32>
    %cst_5 = arith.constant dense<0xFF800000> : vector<16x8xf32>
    %21 = vector.multi_reduction <maximumf>, %20, %cst_5 [1] : vector<16x16x8xf32> to vector<16x8xf32>
    %c4_i32_6 = arith.constant 4 : i32
    %22 = arith.muli %arg0, %c4_i32_6 : i32
    %c0_i32_7 = arith.constant 0 : i32
    %23 = arith.addi %22, %c0_i32_7 : i32
    %24 = arith.index_cast %23 : i32 to index
    %25 = memref.load %arg2[%24] : memref<32xi32, #tpu.memory_space<smem>>
    %c4_i32_8 = arith.constant 4 : i32
    %26 = arith.muli %arg0, %c4_i32_8 : i32
    %c0_i32_9 = arith.constant 0 : i32
    %27 = arith.addi %26, %c0_i32_9 : i32
    %28 = arith.index_cast %27 : i32 to index
    %29 = memref.load %arg3[%28] : memref<32xi32, #tpu.memory_space<smem>>
    %30 = vector.broadcast %25 : i32 to vector<16x1xi32>
    %31 = arith.cmpi sge, %3, %30 : vector<16x1xi32>
    %32 = vector.broadcast %29 : i32 to vector<16x1xi32>
    %33 = arith.cmpi slt, %3, %32 : vector<16x1xi32>
    %34 = arith.andi %31, %33 : vector<16x1xi1>
    %cst_10 = arith.constant -3.000000e+38 : f32
    %35 = vector.shape_cast %34 : vector<16x1xi1> to vector<16x1xi1>
    %36 = vector.broadcast %35 : vector<16x1xi1> to vector<16x8xi1>
    %37 = vector.broadcast %cst_10 : f32 to vector<16x8xf32>
    %38 = arith.select %36, %21, %37 : vector<16x8xi1>, vector<16x8xf32>
    %cst_11 = arith.constant dense<0xFF800000> : vector<8xf32>
    %39 = vector.multi_reduction <maximumf>, %38, %cst_11 [0] : vector<16x8xf32> to vector<8xf32>
    %40 = vector.shape_cast %39 : vector<8xf32> to vector<1x8xf32>
    %cst_12 = arith.constant -9.99999993E+36 : f32
    %41 = vector.broadcast %cst_12 : f32 to vector<1x8xf32>
    %42 = arith.cmpf olt, %40, %41 : vector<1x8xf32>
    %cst_13 = arith.constant 0.000000e+00 : f32
    %43 = vector.broadcast %cst_13 : f32 to vector<1x8xf32>
    %44 = arith.select %42, %43, %40 : vector<1x8xi1>, vector<1x8xf32>
    %c4_i32_14 = arith.constant 4 : i32
    %45 = arith.muli %arg0, %c4_i32_14 : i32
    %c1_i32 = arith.constant 1 : i32
    %46 = arith.addi %45, %c1_i32 : i32
    %47 = arith.index_cast %46 : i32 to index
    %48 = memref.load %arg2[%47] : memref<32xi32, #tpu.memory_space<smem>>
    %c4_i32_15 = arith.constant 4 : i32
    %49 = arith.muli %arg0, %c4_i32_15 : i32
    %c1_i32_16 = arith.constant 1 : i32
    %50 = arith.addi %49, %c1_i32_16 : i32
    %51 = arith.index_cast %50 : i32 to index
    %52 = memref.load %arg3[%51] : memref<32xi32, #tpu.memory_space<smem>>
    %53 = vector.broadcast %48 : i32 to vector<16x1xi32>
    %54 = arith.cmpi sge, %3, %53 : vector<16x1xi32>
    %55 = vector.broadcast %52 : i32 to vector<16x1xi32>
    %56 = arith.cmpi slt, %3, %55 : vector<16x1xi32>
    %57 = arith.andi %54, %56 : vector<16x1xi1>
    %cst_17 = arith.constant -3.000000e+38 : f32
    %58 = vector.shape_cast %57 : vector<16x1xi1> to vector<16x1xi1>
    %59 = vector.broadcast %58 : vector<16x1xi1> to vector<16x8xi1>
    %60 = vector.broadcast %cst_17 : f32 to vector<16x8xf32>
    %61 = arith.select %59, %21, %60 : vector<16x8xi1>, vector<16x8xf32>
    %cst_18 = arith.constant dense<0xFF800000> : vector<8xf32>
    %62 = vector.multi_reduction <maximumf>, %61, %cst_18 [0] : vector<16x8xf32> to vector<8xf32>
    %63 = vector.shape_cast %62 : vector<8xf32> to vector<1x8xf32>
    %cst_19 = arith.constant -9.99999993E+36 : f32
    %64 = vector.broadcast %cst_19 : f32 to vector<1x8xf32>
    %65 = arith.cmpf olt, %63, %64 : vector<1x8xf32>
    %cst_20 = arith.constant 0.000000e+00 : f32
    %66 = vector.broadcast %cst_20 : f32 to vector<1x8xf32>
    %67 = arith.select %65, %66, %63 : vector<1x8xi1>, vector<1x8xf32>
    %c4_i32_21 = arith.constant 4 : i32
    %68 = arith.muli %arg0, %c4_i32_21 : i32
    %c2_i32 = arith.constant 2 : i32
    %69 = arith.addi %68, %c2_i32 : i32
    %70 = arith.index_cast %69 : i32 to index
    %71 = memref.load %arg2[%70] : memref<32xi32, #tpu.memory_space<smem>>
    %c4_i32_22 = arith.constant 4 : i32
    %72 = arith.muli %arg0, %c4_i32_22 : i32
    %c2_i32_23 = arith.constant 2 : i32
    %73 = arith.addi %72, %c2_i32_23 : i32
    %74 = arith.index_cast %73 : i32 to index
    %75 = memref.load %arg3[%74] : memref<32xi32, #tpu.memory_space<smem>>
    %76 = vector.broadcast %71 : i32 to vector<16x1xi32>
    %77 = arith.cmpi sge, %3, %76 : vector<16x1xi32>
    %78 = vector.broadcast %75 : i32 to vector<16x1xi32>
    %79 = arith.cmpi slt, %3, %78 : vector<16x1xi32>
    %80 = arith.andi %77, %79 : vector<16x1xi1>
    %cst_24 = arith.constant -3.000000e+38 : f32
    %81 = vector.shape_cast %80 : vector<16x1xi1> to vector<16x1xi1>
    %82 = vector.broadcast %81 : vector<16x1xi1> to vector<16x8xi1>
    %83 = vector.broadcast %cst_24 : f32 to vector<16x8xf32>
    %84 = arith.select %82, %21, %83 : vector<16x8xi1>, vector<16x8xf32>
    %cst_25 = arith.constant dense<0xFF800000> : vector<8xf32>
    %85 = vector.multi_reduction <maximumf>, %84, %cst_25 [0] : vector<16x8xf32> to vector<8xf32>
    %86 = vector.shape_cast %85 : vector<8xf32> to vector<1x8xf32>
    %cst_26 = arith.constant -9.99999993E+36 : f32
    %87 = vector.broadcast %cst_26 : f32 to vector<1x8xf32>
    %88 = arith.cmpf olt, %86, %87 : vector<1x8xf32>
    %cst_27 = arith.constant 0.000000e+00 : f32
    %89 = vector.broadcast %cst_27 : f32 to vector<1x8xf32>
    %90 = arith.select %88, %89, %86 : vector<1x8xi1>, vector<1x8xf32>
    %c4_i32_28 = arith.constant 4 : i32
    %91 = arith.muli %arg0, %c4_i32_28 : i32
    %c3_i32 = arith.constant 3 : i32
    %92 = arith.addi %91, %c3_i32 : i32
    %93 = arith.index_cast %92 : i32 to index
    %94 = memref.load %arg2[%93] : memref<32xi32, #tpu.memory_space<smem>>
    %c4_i32_29 = arith.constant 4 : i32
    %95 = arith.muli %arg0, %c4_i32_29 : i32
    %c3_i32_30 = arith.constant 3 : i32
    %96 = arith.addi %95, %c3_i32_30 : i32
    %97 = arith.index_cast %96 : i32 to index
    %98 = memref.load %arg3[%97] : memref<32xi32, #tpu.memory_space<smem>>
    %99 = vector.broadcast %94 : i32 to vector<16x1xi32>
    %100 = arith.cmpi sge, %3, %99 : vector<16x1xi32>
    %101 = vector.broadcast %98 : i32 to vector<16x1xi32>
    %102 = arith.cmpi slt, %3, %101 : vector<16x1xi32>
    %103 = arith.andi %100, %102 : vector<16x1xi1>
    %cst_31 = arith.constant -3.000000e+38 : f32
    %104 = vector.shape_cast %103 : vector<16x1xi1> to vector<16x1xi1>
    %105 = vector.broadcast %104 : vector<16x1xi1> to vector<16x8xi1>
    %106 = vector.broadcast %cst_31 : f32 to vector<16x8xf32>
    %107 = arith.select %105, %21, %106 : vector<16x8xi1>, vector<16x8xf32>
    %cst_32 = arith.constant dense<0xFF800000> : vector<8xf32>
    %108 = vector.multi_reduction <maximumf>, %107, %cst_32 [0] : vector<16x8xf32> to vector<8xf32>
    %109 = vector.shape_cast %108 : vector<8xf32> to vector<1x8xf32>
    %cst_33 = arith.constant -9.99999993E+36 : f32
    %110 = vector.broadcast %cst_33 : f32 to vector<1x8xf32>
    %111 = arith.cmpf olt, %109, %110 : vector<1x8xf32>
    %cst_34 = arith.constant 0.000000e+00 : f32
    %112 = vector.broadcast %cst_34 : f32 to vector<1x8xf32>
    %113 = arith.select %111, %112, %109 : vector<1x8xi1>, vector<1x8xf32>
    %114 = tpu.concatenate %44, %67, %90, %113 in 0 : vector<1x8xf32>, vector<1x8xf32>, vector<1x8xf32>, vector<1x8xf32> -> vector<4x8xf32>
    %115 = arith.truncf %114 : vector<4x8xf32> to vector<4x8xbf16>
    %c0_35 = arith.constant 0 : index
    %c0_36 = arith.constant 0 : index
    %c0_37 = arith.constant 0 : index
    %116 = vector.load %arg7[%c0_35, %c0_36, %c0_37] : memref<1x16x8xbf16, #tpu.memory_space<vmem>>, vector<1x4x8xbf16>
    %117 = vector.shape_cast %116 : vector<1x4x8xbf16> to vector<4x8xbf16>
    %118 = vector.shape_cast %115 : vector<4x8xbf16> to vector<1x4x8xbf16>
    tpu.vector_store %arg7[%c0_35, %c0_36, %c0_37], %118 {strides = array<i32>} : memref<1x16x8xbf16, #tpu.memory_space<vmem>>, vector<1x4x8xbf16>,
    %c4_i32_38 = arith.constant 4 : i32
    %119 = arith.muli %arg0, %c4_i32_38 : i32
    %c1_i32_39 = arith.constant 1 : i32
    %120 = arith.addi %119, %c1_i32_39 : i32
    %121 = arith.index_cast %120 : i32 to index
    %122 = memref.load %arg4[%121] : memref<32xi32, #tpu.memory_space<smem>>
    %c4_i32_40 = arith.constant 4 : i32
    %123 = arith.muli %arg0, %c4_i32_40 : i32
    %c1_i32_41 = arith.constant 1 : i32
    %124 = arith.addi %123, %c1_i32_41 : i32
    %125 = arith.index_cast %124 : i32 to index
    %126 = memref.load %arg5[%125] : memref<32xi32, #tpu.memory_space<smem>>
    %127 = vector.broadcast %122 : i32 to vector<1x16x1xi32>
    %128 = arith.cmpi sge, %2, %127 : vector<1x16x1xi32>
    %129 = vector.broadcast %126 : i32 to vector<1x16x1xi32>
    %130 = arith.cmpi slt, %2, %129 : vector<1x16x1xi32>
    %131 = arith.andi %128, %130 : vector<1x16x1xi1>
    %cst_42 = arith.constant -3.000000e+38 : f32
    %132 = vector.shape_cast %131 : vector<1x16x1xi1> to vector<1x16x1xi1>
    %133 = vector.broadcast %132 : vector<1x16x1xi1> to vector<16x16x8xi1>
    %134 = vector.broadcast %cst_42 : f32 to vector<16x16x8xf32>
    %135 = arith.select %133, %1, %134 : vector<16x16x8xi1>, vector<16x16x8xf32>
    %cst_43 = arith.constant dense<0xFF800000> : vector<16x8xf32>
    %136 = vector.multi_reduction <maximumf>, %135, %cst_43 [1] : vector<16x16x8xf32> to vector<16x8xf32>
    %c4_i32_44 = arith.constant 4 : i32
    %137 = arith.muli %arg0, %c4_i32_44 : i32
    %c0_i32_45 = arith.constant 0 : i32
    %138 = arith.addi %137, %c0_i32_45 : i32
    %139 = arith.index_cast %138 : i32 to index
    %140 = memref.load %arg2[%139] : memref<32xi32, #tpu.memory_space<smem>>
    %c4_i32_46 = arith.constant 4 : i32
    %141 = arith.muli %arg0, %c4_i32_46 : i32
    %c0_i32_47 = arith.constant 0 : i32
    %142 = arith.addi %141, %c0_i32_47 : i32
    %143 = arith.index_cast %142 : i32 to index
    %144 = memref.load %arg3[%143] : memref<32xi32, #tpu.memory_space<smem>>
    %145 = vector.broadcast %140 : i32 to vector<16x1xi32>
    %146 = arith.cmpi sge, %3, %145 : vector<16x1xi32>
    %147 = vector.broadcast %144 : i32 to vector<16x1xi32>
    %148 = arith.cmpi slt, %3, %147 : vector<16x1xi32>
    %149 = arith.andi %146, %148 : vector<16x1xi1>
    %cst_48 = arith.constant -3.000000e+38 : f32
    %150 = vector.shape_cast %149 : vector<16x1xi1> to vector<16x1xi1>
    %151 = vector.broadcast %150 : vector<16x1xi1> to vector<16x8xi1>
    %152 = vector.broadcast %cst_48 : f32 to vector<16x8xf32>
    %153 = arith.select %151, %136, %152 : vector<16x8xi1>, vector<16x8xf32>
    %cst_49 = arith.constant dense<0xFF800000> : vector<8xf32>
    %154 = vector.multi_reduction <maximumf>, %153, %cst_49 [0] : vector<16x8xf32> to vector<8xf32>
    %155 = vector.shape_cast %154 : vector<8xf32> to vector<1x8xf32>
    %cst_50 = arith.constant -9.99999993E+36 : f32
    %156 = vector.broadcast %cst_50 : f32 to vector<1x8xf32>
    %157 = arith.cmpf olt, %155, %156 : vector<1x8xf32>
    %cst_51 = arith.constant 0.000000e+00 : f32
    %158 = vector.broadcast %cst_51 : f32 to vector<1x8xf32>
    %159 = arith.select %157, %158, %155 : vector<1x8xi1>, vector<1x8xf32>
    %c4_i32_52 = arith.constant 4 : i32
    %160 = arith.muli %arg0, %c4_i32_52 : i32
    %c1_i32_53 = arith.constant 1 : i32
    %161 = arith.addi %160, %c1_i32_53 : i32
    %162 = arith.index_cast %161 : i32 to index
    %163 = memref.load %arg2[%162] : memref<32xi32, #tpu.memory_space<smem>>
    %c4_i32_54 = arith.constant 4 : i32
    %164 = arith.muli %arg0, %c4_i32_54 : i32
    %c1_i32_55 = arith.constant 1 : i32
    %165 = arith.addi %164, %c1_i32_55 : i32
    %166 = arith.index_cast %165 : i32 to index
    %167 = memref.load %arg3[%166] : memref<32xi32, #tpu.memory_space<smem>>
    %168 = vector.broadcast %163 : i32 to vector<16x1xi32>
    %169 = arith.cmpi sge, %3, %168 : vector<16x1xi32>
    %170 = vector.broadcast %167 : i32 to vector<16x1xi32>
    %171 = arith.cmpi slt, %3, %170 : vector<16x1xi32>
    %172 = arith.andi %169, %171 : vector<16x1xi1>
    %cst_56 = arith.constant -3.000000e+38 : f32
    %173 = vector.shape_cast %172 : vector<16x1xi1> to vector<16x1xi1>
    %174 = vector.broadcast %173 : vector<16x1xi1> to vector<16x8xi1>
    %175 = vector.broadcast %cst_56 : f32 to vector<16x8xf32>
    %176 = arith.select %174, %136, %175 : vector<16x8xi1>, vector<16x8xf32>
    %cst_57 = arith.constant dense<0xFF800000> : vector<8xf32>
    %177 = vector.multi_reduction <maximumf>, %176, %cst_57 [0] : vector<16x8xf32> to vector<8xf32>
    %178 = vector.shape_cast %177 : vector<8xf32> to vector<1x8xf32>
    %cst_58 = arith.constant -9.99999993E+36 : f32
    %179 = vector.broadcast %cst_58 : f32 to vector<1x8xf32>
    %180 = arith.cmpf olt, %178, %179 : vector<1x8xf32>
    %cst_59 = arith.constant 0.000000e+00 : f32
    %181 = vector.broadcast %cst_59 : f32 to vector<1x8xf32>
    %182 = arith.select %180, %181, %178 : vector<1x8xi1>, vector<1x8xf32>
    %c4_i32_60 = arith.constant 4 : i32
    %183 = arith.muli %arg0, %c4_i32_60 : i32
    %c2_i32_61 = arith.constant 2 : i32
    %184 = arith.addi %183, %c2_i32_61 : i32
    %185 = arith.index_cast %184 : i32 to index
    %186 = memref.load %arg2[%185] : memref<32xi32, #tpu.memory_space<smem>>
    %c4_i32_62 = arith.constant 4 : i32
    %187 = arith.muli %arg0, %c4_i32_62 : i32
    %c2_i32_63 = arith.constant 2 : i32
    %188 = arith.addi %187, %c2_i32_63 : i32
    %189 = arith.index_cast %188 : i32 to index
    %190 = memref.load %arg3[%189] : memref<32xi32, #tpu.memory_space<smem>>
    %191 = vector.broadcast %186 : i32 to vector<16x1xi32>
    %192 = arith.cmpi sge, %3, %191 : vector<16x1xi32>
    %193 = vector.broadcast %190 : i32 to vector<16x1xi32>
    %194 = arith.cmpi slt, %3, %193 : vector<16x1xi32>
    %195 = arith.andi %192, %194 : vector<16x1xi1>
    %cst_64 = arith.constant -3.000000e+38 : f32
    %196 = vector.shape_cast %195 : vector<16x1xi1> to vector<16x1xi1>
    %197 = vector.broadcast %196 : vector<16x1xi1> to vector<16x8xi1>
    %198 = vector.broadcast %cst_64 : f32 to vector<16x8xf32>
    %199 = arith.select %197, %136, %198 : vector<16x8xi1>, vector<16x8xf32>
    %cst_65 = arith.constant dense<0xFF800000> : vector<8xf32>
    %200 = vector.multi_reduction <maximumf>, %199, %cst_65 [0] : vector<16x8xf32> to vector<8xf32>
    %201 = vector.shape_cast %200 : vector<8xf32> to vector<1x8xf32>
    %cst_66 = arith.constant -9.99999993E+36 : f32
    %202 = vector.broadcast %cst_66 : f32 to vector<1x8xf32>
    %203 = arith.cmpf olt, %201, %202 : vector<1x8xf32>
    %cst_67 = arith.constant 0.000000e+00 : f32
    %204 = vector.broadcast %cst_67 : f32 to vector<1x8xf32>
    %205 = arith.select %203, %204, %201 : vector<1x8xi1>, vector<1x8xf32>
    %c4_i32_68 = arith.constant 4 : i32
    %206 = arith.muli %arg0, %c4_i32_68 : i32
    %c3_i32_69 = arith.constant 3 : i32
    %207 = arith.addi %206, %c3_i32_69 : i32
    %208 = arith.index_cast %207 : i32 to index
    %209 = memref.load %arg2[%208] : memref<32xi32, #tpu.memory_space<smem>>
    %c4_i32_70 = arith.constant 4 : i32
    %210 = arith.muli %arg0, %c4_i32_70 : i32
    %c3_i32_71 = arith.constant 3 : i32
    %211 = arith.addi %210, %c3_i32_71 : i32
    %212 = arith.index_cast %211 : i32 to index
    %213 = memref.load %arg3[%212] : memref<32xi32, #tpu.memory_space<smem>>
    %214 = vector.broadcast %209 : i32 to vector<16x1xi32>
    %215 = arith.cmpi sge, %3, %214 : vector<16x1xi32>
    %216 = vector.broadcast %213 : i32 to vector<16x1xi32>
    %217 = arith.cmpi slt, %3, %216 : vector<16x1xi32>
    %218 = arith.andi %215, %217 : vector<16x1xi1>
    %cst_72 = arith.constant -3.000000e+38 : f32
    %219 = vector.shape_cast %218 : vector<16x1xi1> to vector<16x1xi1>
    %220 = vector.broadcast %219 : vector<16x1xi1> to vector<16x8xi1>
    %221 = vector.broadcast %cst_72 : f32 to vector<16x8xf32>
    %222 = arith.select %220, %136, %221 : vector<16x8xi1>, vector<16x8xf32>
    %cst_73 = arith.constant dense<0xFF800000> : vector<8xf32>
    %223 = vector.multi_reduction <maximumf>, %222, %cst_73 [0] : vector<16x8xf32> to vector<8xf32>
    %224 = vector.shape_cast %223 : vector<8xf32> to vector<1x8xf32>
    %cst_74 = arith.constant -9.99999993E+36 : f32
    %225 = vector.broadcast %cst_74 : f32 to vector<1x8xf32>
    %226 = arith.cmpf olt, %224, %225 : vector<1x8xf32>
    %cst_75 = arith.constant 0.000000e+00 : f32
    %227 = vector.broadcast %cst_75 : f32 to vector<1x8xf32>
    %228 = arith.select %226, %227, %224 : vector<1x8xi1>, vector<1x8xf32>
    %229 = tpu.concatenate %159, %182, %205, %228 in 0 : vector<1x8xf32>, vector<1x8xf32>, vector<1x8xf32>, vector<1x8xf32> -> vector<4x8xf32>
    %230 = arith.truncf %229 : vector<4x8xf32> to vector<4x8xbf16>
    %c0_76 = arith.constant 0 : index
    %c4 = arith.constant 4 : index
    %c0_77 = arith.constant 0 : index
    %231 = vector.load %arg7[%c0_76, %c4, %c0_77] : memref<1x16x8xbf16, #tpu.memory_space<vmem>>, vector<1x4x8xbf16>
    %232 = vector.shape_cast %231 : vector<1x4x8xbf16> to vector<4x8xbf16>
    %233 = vector.shape_cast %230 : vector<4x8xbf16> to vector<1x4x8xbf16>
    tpu.vector_store %arg7[%c0_76, %c4, %c0_77], %233 {strides = array<i32>} : memref<1x16x8xbf16, #tpu.memory_space<vmem>>, vector<1x4x8xbf16>,
    %c4_i32_78 = arith.constant 4 : i32
    %234 = arith.muli %arg0, %c4_i32_78 : i32
    %c2_i32_79 = arith.constant 2 : i32
    %235 = arith.addi %234, %c2_i32_79 : i32
    %236 = arith.index_cast %235 : i32 to index
    %237 = memref.load %arg4[%236] : memref<32xi32, #tpu.memory_space<smem>>
    %c4_i32_80 = arith.constant 4 : i32
    %238 = arith.muli %arg0, %c4_i32_80 : i32
    %c2_i32_81 = arith.constant 2 : i32
    %239 = arith.addi %238, %c2_i32_81 : i32
    %240 = arith.index_cast %239 : i32 to index
    %241 = memref.load %arg5[%240] : memref<32xi32, #tpu.memory_space<smem>>
    %242 = vector.broadcast %237 : i32 to vector<1x16x1xi32>
    %243 = arith.cmpi sge, %2, %242 : vector<1x16x1xi32>
    %244 = vector.broadcast %241 : i32 to vector<1x16x1xi32>
    %245 = arith.cmpi slt, %2, %244 : vector<1x16x1xi32>
    %246 = arith.andi %243, %245 : vector<1x16x1xi1>
    %cst_82 = arith.constant -3.000000e+38 : f32
    %247 = vector.shape_cast %246 : vector<1x16x1xi1> to vector<1x16x1xi1>
    %248 = vector.broadcast %247 : vector<1x16x1xi1> to vector<16x16x8xi1>
    %249 = vector.broadcast %cst_82 : f32 to vector<16x16x8xf32>
    %250 = arith.select %248, %1, %249 : vector<16x16x8xi1>, vector<16x16x8xf32>
    %cst_83 = arith.constant dense<0xFF800000> : vector<16x8xf32>
    %251 = vector.multi_reduction <maximumf>, %250, %cst_83 [1] : vector<16x16x8xf32> to vector<16x8xf32>
    %c4_i32_84 = arith.constant 4 : i32
    %252 = arith.muli %arg0, %c4_i32_84 : i32
    %c0_i32_85 = arith.constant 0 : i32
    %253 = arith.addi %252, %c0_i32_85 : i32
    %254 = arith.index_cast %253 : i32 to index
    %255 = memref.load %arg2[%254] : memref<32xi32, #tpu.memory_space<smem>>
    %c4_i32_86 = arith.constant 4 : i32
    %256 = arith.muli %arg0, %c4_i32_86 : i32
    %c0_i32_87 = arith.constant 0 : i32
    %257 = arith.addi %256, %c0_i32_87 : i32
    %258 = arith.index_cast %257 : i32 to index
    %259 = memref.load %arg3[%258] : memref<32xi32, #tpu.memory_space<smem>>
    %260 = vector.broadcast %255 : i32 to vector<16x1xi32>
    %261 = arith.cmpi sge, %3, %260 : vector<16x1xi32>
    %262 = vector.broadcast %259 : i32 to vector<16x1xi32>
    %263 = arith.cmpi slt, %3, %262 : vector<16x1xi32>
    %264 = arith.andi %261, %263 : vector<16x1xi1>
    %cst_88 = arith.constant -3.000000e+38 : f32
    %265 = vector.shape_cast %264 : vector<16x1xi1> to vector<16x1xi1>
    %266 = vector.broadcast %265 : vector<16x1xi1> to vector<16x8xi1>
    %267 = vector.broadcast %cst_88 : f32 to vector<16x8xf32>
    %268 = arith.select %266, %251, %267 : vector<16x8xi1>, vector<16x8xf32>
    %cst_89 = arith.constant dense<0xFF800000> : vector<8xf32>
    %269 = vector.multi_reduction <maximumf>, %268, %cst_89 [0] : vector<16x8xf32> to vector<8xf32>
    %270 = vector.shape_cast %269 : vector<8xf32> to vector<1x8xf32>
    %cst_90 = arith.constant -9.99999993E+36 : f32
    %271 = vector.broadcast %cst_90 : f32 to vector<1x8xf32>
    %272 = arith.cmpf olt, %270, %271 : vector<1x8xf32>
    %cst_91 = arith.constant 0.000000e+00 : f32
    %273 = vector.broadcast %cst_91 : f32 to vector<1x8xf32>
    %274 = arith.select %272, %273, %270 : vector<1x8xi1>, vector<1x8xf32>
    %c4_i32_92 = arith.constant 4 : i32
    %275 = arith.muli %arg0, %c4_i32_92 : i32
    %c1_i32_93 = arith.constant 1 : i32
    %276 = arith.addi %275, %c1_i32_93 : i32
    %277 = arith.index_cast %276 : i32 to index
    %278 = memref.load %arg2[%277] : memref<32xi32, #tpu.memory_space<smem>>
    %c4_i32_94 = arith.constant 4 : i32
    %279 = arith.muli %arg0, %c4_i32_94 : i32
    %c1_i32_95 = arith.constant 1 : i32
    %280 = arith.addi %279, %c1_i32_95 : i32
    %281 = arith.index_cast %280 : i32 to index
    %282 = memref.load %arg3[%281] : memref<32xi32, #tpu.memory_space<smem>>
    %283 = vector.broadcast %278 : i32 to vector<16x1xi32>
    %284 = arith.cmpi sge, %3, %283 : vector<16x1xi32>
    %285 = vector.broadcast %282 : i32 to vector<16x1xi32>
    %286 = arith.cmpi slt, %3, %285 : vector<16x1xi32>
    %287 = arith.andi %284, %286 : vector<16x1xi1>
    %cst_96 = arith.constant -3.000000e+38 : f32
    %288 = vector.shape_cast %287 : vector<16x1xi1> to vector<16x1xi1>
    %289 = vector.broadcast %288 : vector<16x1xi1> to vector<16x8xi1>
    %290 = vector.broadcast %cst_96 : f32 to vector<16x8xf32>
    %291 = arith.select %289, %251, %290 : vector<16x8xi1>, vector<16x8xf32>
    %cst_97 = arith.constant dense<0xFF800000> : vector<8xf32>
    %292 = vector.multi_reduction <maximumf>, %291, %cst_97 [0] : vector<16x8xf32> to vector<8xf32>
    %293 = vector.shape_cast %292 : vector<8xf32> to vector<1x8xf32>
    %cst_98 = arith.constant -9.99999993E+36 : f32
    %294 = vector.broadcast %cst_98 : f32 to vector<1x8xf32>
    %295 = arith.cmpf olt, %293, %294 : vector<1x8xf32>
    %cst_99 = arith.constant 0.000000e+00 : f32
    %296 = vector.broadcast %cst_99 : f32 to vector<1x8xf32>
    %297 = arith.select %295, %296, %293 : vector<1x8xi1>, vector<1x8xf32>
    %c4_i32_100 = arith.constant 4 : i32
    %298 = arith.muli %arg0, %c4_i32_100 : i32
    %c2_i32_101 = arith.constant 2 : i32
    %299 = arith.addi %298, %c2_i32_101 : i32
    %300 = arith.index_cast %299 : i32 to index
    %301 = memref.load %arg2[%300] : memref<32xi32, #tpu.memory_space<smem>>
    %c4_i32_102 = arith.constant 4 : i32
    %302 = arith.muli %arg0, %c4_i32_102 : i32
    %c2_i32_103 = arith.constant 2 : i32
    %303 = arith.addi %302, %c2_i32_103 : i32
    %304 = arith.index_cast %303 : i32 to index
    %305 = memref.load %arg3[%304] : memref<32xi32, #tpu.memory_space<smem>>
    %306 = vector.broadcast %301 : i32 to vector<16x1xi32>
    %307 = arith.cmpi sge, %3, %306 : vector<16x1xi32>
    %308 = vector.broadcast %305 : i32 to vector<16x1xi32>
    %309 = arith.cmpi slt, %3, %308 : vector<16x1xi32>
    %310 = arith.andi %307, %309 : vector<16x1xi1>
    %cst_104 = arith.constant -3.000000e+38 : f32
    %311 = vector.shape_cast %310 : vector<16x1xi1> to vector<16x1xi1>
    %312 = vector.broadcast %311 : vector<16x1xi1> to vector<16x8xi1>
    %313 = vector.broadcast %cst_104 : f32 to vector<16x8xf32>
    %314 = arith.select %312, %251, %313 : vector<16x8xi1>, vector<16x8xf32>
    %cst_105 = arith.constant dense<0xFF800000> : vector<8xf32>
    %315 = vector.multi_reduction <maximumf>, %314, %cst_105 [0] : vector<16x8xf32> to vector<8xf32>
    %316 = vector.shape_cast %315 : vector<8xf32> to vector<1x8xf32>
    %cst_106 = arith.constant -9.99999993E+36 : f32
    %317 = vector.broadcast %cst_106 : f32 to vector<1x8xf32>
    %318 = arith.cmpf olt, %316, %317 : vector<1x8xf32>
    %cst_107 = arith.constant 0.000000e+00 : f32
    %319 = vector.broadcast %cst_107 : f32 to vector<1x8xf32>
    %320 = arith.select %318, %319, %316 : vector<1x8xi1>, vector<1x8xf32>
    %c4_i32_108 = arith.constant 4 : i32
    %321 = arith.muli %arg0, %c4_i32_108 : i32
    %c3_i32_109 = arith.constant 3 : i32
    %322 = arith.addi %321, %c3_i32_109 : i32
    %323 = arith.index_cast %322 : i32 to index
    %324 = memref.load %arg2[%323] : memref<32xi32, #tpu.memory_space<smem>>
    %c4_i32_110 = arith.constant 4 : i32
    %325 = arith.muli %arg0, %c4_i32_110 : i32
    %c3_i32_111 = arith.constant 3 : i32
    %326 = arith.addi %325, %c3_i32_111 : i32
    %327 = arith.index_cast %326 : i32 to index
    %328 = memref.load %arg3[%327] : memref<32xi32, #tpu.memory_space<smem>>
    %329 = vector.broadcast %324 : i32 to vector<16x1xi32>
    %330 = arith.cmpi sge, %3, %329 : vector<16x1xi32>
    %331 = vector.broadcast %328 : i32 to vector<16x1xi32>
    %332 = arith.cmpi slt, %3, %331 : vector<16x1xi32>
    %333 = arith.andi %330, %332 : vector<16x1xi1>
    %cst_112 = arith.constant -3.000000e+38 : f32
    %334 = vector.shape_cast %333 : vector<16x1xi1> to vector<16x1xi1>
    %335 = vector.broadcast %334 : vector<16x1xi1> to vector<16x8xi1>
    %336 = vector.broadcast %cst_112 : f32 to vector<16x8xf32>
    %337 = arith.select %335, %251, %336 : vector<16x8xi1>, vector<16x8xf32>
    %cst_113 = arith.constant dense<0xFF800000> : vector<8xf32>
    %338 = vector.multi_reduction <maximumf>, %337, %cst_113 [0] : vector<16x8xf32> to vector<8xf32>
    %339 = vector.shape_cast %338 : vector<8xf32> to vector<1x8xf32>
    %cst_114 = arith.constant -9.99999993E+36 : f32
    %340 = vector.broadcast %cst_114 : f32 to vector<1x8xf32>
    %341 = arith.cmpf olt, %339, %340 : vector<1x8xf32>
    %cst_115 = arith.constant 0.000000e+00 : f32
    %342 = vector.broadcast %cst_115 : f32 to vector<1x8xf32>
    %343 = arith.select %341, %342, %339 : vector<1x8xi1>, vector<1x8xf32>
    %344 = tpu.concatenate %274, %297, %320, %343 in 0 : vector<1x8xf32>, vector<1x8xf32>, vector<1x8xf32>, vector<1x8xf32> -> vector<4x8xf32>
    %345 = arith.truncf %344 : vector<4x8xf32> to vector<4x8xbf16>
    %c0_116 = arith.constant 0 : index
    %c8 = arith.constant 8 : index
    %c0_117 = arith.constant 0 : index
    %346 = vector.load %arg7[%c0_116, %c8, %c0_117] : memref<1x16x8xbf16, #tpu.memory_space<vmem>>, vector<1x4x8xbf16>
    %347 = vector.shape_cast %346 : vector<1x4x8xbf16> to vector<4x8xbf16>
    %348 = vector.shape_cast %345 : vector<4x8xbf16> to vector<1x4x8xbf16>
    tpu.vector_store %arg7[%c0_116, %c8, %c0_117], %348 {strides = array<i32>} : memref<1x16x8xbf16, #tpu.memory_space<vmem>>, vector<1x4x8xbf16>,
    %c4_i32_118 = arith.constant 4 : i32
    %349 = arith.muli %arg0, %c4_i32_118 : i32
    %c3_i32_119 = arith.constant 3 : i32
    %350 = arith.addi %349, %c3_i32_119 : i32
    %351 = arith.index_cast %350 : i32 to index
    %352 = memref.load %arg4[%351] : memref<32xi32, #tpu.memory_space<smem>>
    %c4_i32_120 = arith.constant 4 : i32
    %353 = arith.muli %arg0, %c4_i32_120 : i32
    %c3_i32_121 = arith.constant 3 : i32
    %354 = arith.addi %353, %c3_i32_121 : i32
    %355 = arith.index_cast %354 : i32 to index
    %356 = memref.load %arg5[%355] : memref<32xi32, #tpu.memory_space<smem>>
    %357 = vector.broadcast %352 : i32 to vector<1x16x1xi32>
    %358 = arith.cmpi sge, %2, %357 : vector<1x16x1xi32>
    %359 = vector.broadcast %356 : i32 to vector<1x16x1xi32>
    %360 = arith.cmpi slt, %2, %359 : vector<1x16x1xi32>
    %361 = arith.andi %358, %360 : vector<1x16x1xi1>
    %cst_122 = arith.constant -3.000000e+38 : f32
    %362 = vector.shape_cast %361 : vector<1x16x1xi1> to vector<1x16x1xi1>
    %363 = vector.broadcast %362 : vector<1x16x1xi1> to vector<16x16x8xi1>
    %364 = vector.broadcast %cst_122 : f32 to vector<16x16x8xf32>
    %365 = arith.select %363, %1, %364 : vector<16x16x8xi1>, vector<16x16x8xf32>
    %cst_123 = arith.constant dense<0xFF800000> : vector<16x8xf32>
    %366 = vector.multi_reduction <maximumf>, %365, %cst_123 [1] : vector<16x16x8xf32> to vector<16x8xf32>
    %c4_i32_124 = arith.constant 4 : i32
    %367 = arith.muli %arg0, %c4_i32_124 : i32
    %c0_i32_125 = arith.constant 0 : i32
    %368 = arith.addi %367, %c0_i32_125 : i32
    %369 = arith.index_cast %368 : i32 to index
    %370 = memref.load %arg2[%369] : memref<32xi32, #tpu.memory_space<smem>>
    %c4_i32_126 = arith.constant 4 : i32
    %371 = arith.muli %arg0, %c4_i32_126 : i32
    %c0_i32_127 = arith.constant 0 : i32
    %372 = arith.addi %371, %c0_i32_127 : i32
    %373 = arith.index_cast %372 : i32 to index
    %374 = memref.load %arg3[%373] : memref<32xi32, #tpu.memory_space<smem>>
    %375 = vector.broadcast %370 : i32 to vector<16x1xi32>
    %376 = arith.cmpi sge, %3, %375 : vector<16x1xi32>
    %377 = vector.broadcast %374 : i32 to vector<16x1xi32>
    %378 = arith.cmpi slt, %3, %377 : vector<16x1xi32>
    %379 = arith.andi %376, %378 : vector<16x1xi1>
    %cst_128 = arith.constant -3.000000e+38 : f32
    %380 = vector.shape_cast %379 : vector<16x1xi1> to vector<16x1xi1>
    %381 = vector.broadcast %380 : vector<16x1xi1> to vector<16x8xi1>
    %382 = vector.broadcast %cst_128 : f32 to vector<16x8xf32>
    %383 = arith.select %381, %366, %382 : vector<16x8xi1>, vector<16x8xf32>
    %cst_129 = arith.constant dense<0xFF800000> : vector<8xf32>
    %384 = vector.multi_reduction <maximumf>, %383, %cst_129 [0] : vector<16x8xf32> to vector<8xf32>
    %385 = vector.shape_cast %384 : vector<8xf32> to vector<1x8xf32>
    %cst_130 = arith.constant -9.99999993E+36 : f32
    %386 = vector.broadcast %cst_130 : f32 to vector<1x8xf32>
    %387 = arith.cmpf olt, %385, %386 : vector<1x8xf32>
    %cst_131 = arith.constant 0.000000e+00 : f32
    %388 = vector.broadcast %cst_131 : f32 to vector<1x8xf32>
    %389 = arith.select %387, %388, %385 : vector<1x8xi1>, vector<1x8xf32>
    %c4_i32_132 = arith.constant 4 : i32
    %390 = arith.muli %arg0, %c4_i32_132 : i32
    %c1_i32_133 = arith.constant 1 : i32
    %391 = arith.addi %390, %c1_i32_133 : i32
    %392 = arith.index_cast %391 : i32 to index
    %393 = memref.load %arg2[%392] : memref<32xi32, #tpu.memory_space<smem>>
    %c4_i32_134 = arith.constant 4 : i32
    %394 = arith.muli %arg0, %c4_i32_134 : i32
    %c1_i32_135 = arith.constant 1 : i32
    %395 = arith.addi %394, %c1_i32_135 : i32
    %396 = arith.index_cast %395 : i32 to index
    %397 = memref.load %arg3[%396] : memref<32xi32, #tpu.memory_space<smem>>
    %398 = vector.broadcast %393 : i32 to vector<16x1xi32>
    %399 = arith.cmpi sge, %3, %398 : vector<16x1xi32>
    %400 = vector.broadcast %397 : i32 to vector<16x1xi32>
    %401 = arith.cmpi slt, %3, %400 : vector<16x1xi32>
    %402 = arith.andi %399, %401 : vector<16x1xi1>
    %cst_136 = arith.constant -3.000000e+38 : f32
    %403 = vector.shape_cast %402 : vector<16x1xi1> to vector<16x1xi1>
    %404 = vector.broadcast %403 : vector<16x1xi1> to vector<16x8xi1>
    %405 = vector.broadcast %cst_136 : f32 to vector<16x8xf32>
    %406 = arith.select %404, %366, %405 : vector<16x8xi1>, vector<16x8xf32>
    %cst_137 = arith.constant dense<0xFF800000> : vector<8xf32>
    %407 = vector.multi_reduction <maximumf>, %406, %cst_137 [0] : vector<16x8xf32> to vector<8xf32>
    %408 = vector.shape_cast %407 : vector<8xf32> to vector<1x8xf32>
    %cst_138 = arith.constant -9.99999993E+36 : f32
    %409 = vector.broadcast %cst_138 : f32 to vector<1x8xf32>
    %410 = arith.cmpf olt, %408, %409 : vector<1x8xf32>
    %cst_139 = arith.constant 0.000000e+00 : f32
    %411 = vector.broadcast %cst_139 : f32 to vector<1x8xf32>
    %412 = arith.select %410, %411, %408 : vector<1x8xi1>, vector<1x8xf32>
    %c4_i32_140 = arith.constant 4 : i32
    %413 = arith.muli %arg0, %c4_i32_140 : i32
    %c2_i32_141 = arith.constant 2 : i32
    %414 = arith.addi %413, %c2_i32_141 : i32
    %415 = arith.index_cast %414 : i32 to index
    %416 = memref.load %arg2[%415] : memref<32xi32, #tpu.memory_space<smem>>
    %c4_i32_142 = arith.constant 4 : i32
    %417 = arith.muli %arg0, %c4_i32_142 : i32
    %c2_i32_143 = arith.constant 2 : i32
    %418 = arith.addi %417, %c2_i32_143 : i32
    %419 = arith.index_cast %418 : i32 to index
    %420 = memref.load %arg3[%419] : memref<32xi32, #tpu.memory_space<smem>>
    %421 = vector.broadcast %416 : i32 to vector<16x1xi32>
    %422 = arith.cmpi sge, %3, %421 : vector<16x1xi32>
    %423 = vector.broadcast %420 : i32 to vector<16x1xi32>
    %424 = arith.cmpi slt, %3, %423 : vector<16x1xi32>
    %425 = arith.andi %422, %424 : vector<16x1xi1>
    %cst_144 = arith.constant -3.000000e+38 : f32
    %426 = vector.shape_cast %425 : vector<16x1xi1> to vector<16x1xi1>
    %427 = vector.broadcast %426 : vector<16x1xi1> to vector<16x8xi1>
    %428 = vector.broadcast %cst_144 : f32 to vector<16x8xf32>
    %429 = arith.select %427, %366, %428 : vector<16x8xi1>, vector<16x8xf32>
    %cst_145 = arith.constant dense<0xFF800000> : vector<8xf32>
    %430 = vector.multi_reduction <maximumf>, %429, %cst_145 [0] : vector<16x8xf32> to vector<8xf32>
    %431 = vector.shape_cast %430 : vector<8xf32> to vector<1x8xf32>
    %cst_146 = arith.constant -9.99999993E+36 : f32
    %432 = vector.broadcast %cst_146 : f32 to vector<1x8xf32>
    %433 = arith.cmpf olt, %431, %432 : vector<1x8xf32>
    %cst_147 = arith.constant 0.000000e+00 : f32
    %434 = vector.broadcast %cst_147 : f32 to vector<1x8xf32>
    %435 = arith.select %433, %434, %431 : vector<1x8xi1>, vector<1x8xf32>
    %c4_i32_148 = arith.constant 4 : i32
    %436 = arith.muli %arg0, %c4_i32_148 : i32
    %c3_i32_149 = arith.constant 3 : i32
    %437 = arith.addi %436, %c3_i32_149 : i32
    %438 = arith.index_cast %437 : i32 to index
    %439 = memref.load %arg2[%438] : memref<32xi32, #tpu.memory_space<smem>>
    %c4_i32_150 = arith.constant 4 : i32
    %440 = arith.muli %arg0, %c4_i32_150 : i32
    %c3_i32_151 = arith.constant 3 : i32
    %441 = arith.addi %440, %c3_i32_151 : i32
    %442 = arith.index_cast %441 : i32 to index
    %443 = memref.load %arg3[%442] : memref<32xi32, #tpu.memory_space<smem>>
    %444 = vector.broadcast %439 : i32 to vector<16x1xi32>
    %445 = arith.cmpi sge, %3, %444 : vector<16x1xi32>
    %446 = vector.broadcast %443 : i32 to vector<16x1xi32>
    %447 = arith.cmpi slt, %3, %446 : vector<16x1xi32>
    %448 = arith.andi %445, %447 : vector<16x1xi1>
    %cst_152 = arith.constant -3.000000e+38 : f32
    %449 = vector.shape_cast %448 : vector<16x1xi1> to vector<16x1xi1>
    %450 = vector.broadcast %449 : vector<16x1xi1> to vector<16x8xi1>
    %451 = vector.broadcast %cst_152 : f32 to vector<16x8xf32>
    %452 = arith.select %450, %366, %451 : vector<16x8xi1>, vector<16x8xf32>
    %cst_153 = arith.constant dense<0xFF800000> : vector<8xf32>
    %453 = vector.multi_reduction <maximumf>, %452, %cst_153 [0] : vector<16x8xf32> to vector<8xf32>
    %454 = vector.shape_cast %453 : vector<8xf32> to vector<1x8xf32>
    %cst_154 = arith.constant -9.99999993E+36 : f32
    %455 = vector.broadcast %cst_154 : f32 to vector<1x8xf32>
    %456 = arith.cmpf olt, %454, %455 : vector<1x8xf32>
    %cst_155 = arith.constant 0.000000e+00 : f32
    %457 = vector.broadcast %cst_155 : f32 to vector<1x8xf32>
    %458 = arith.select %456, %457, %454 : vector<1x8xi1>, vector<1x8xf32>
    %459 = tpu.concatenate %389, %412, %435, %458 in 0 : vector<1x8xf32>, vector<1x8xf32>, vector<1x8xf32>, vector<1x8xf32> -> vector<4x8xf32>
    %460 = arith.truncf %459 : vector<4x8xf32> to vector<4x8xbf16>
    %c0_156 = arith.constant 0 : index
    %c12 = arith.constant 12 : index
    %c0_157 = arith.constant 0 : index
    %461 = vector.load %arg7[%c0_156, %c12, %c0_157] : memref<1x16x8xbf16, #tpu.memory_space<vmem>>, vector<1x4x8xbf16>
    %462 = vector.shape_cast %461 : vector<1x4x8xbf16> to vector<4x8xbf16>
    %463 = vector.shape_cast %460 : vector<4x8xbf16> to vector<1x4x8xbf16>
    tpu.vector_store %arg7[%c0_156, %c12, %c0_157], %463 {strides = array<i32>} : memref<1x16x8xbf16, #tpu.memory_space<vmem>>, vector<1x4x8xbf16>,
    return
  }
  func.func @transform_0(%arg0: i32, %arg1: memref<8xi32, #tpu.memory_space<smem>>, %arg2: memref<32xi32, #tpu.memory_space<smem>>, %arg3: memref<32xi32, #tpu.memory_space<smem>>, %arg4: memref<32xi32, #tpu.memory_space<smem>>, %arg5: memref<32xi32, #tpu.memory_space<smem>>) -> (i32, i32, i32, i32) {
    %0 = arith.index_cast %arg0 : i32 to index
    %1 = memref.load %arg1[%0] : memref<8xi32, #tpu.memory_space<smem>>
    %c0_i32 = arith.constant 0 : i32
    %c0_i32_0 = arith.constant 0 : i32
    %c0_i32_1 = arith.constant 0 : i32
    %c0_i32_2 = arith.constant 0 : i32
    return %1, %c0_i32, %c0_i32_0, %c0_i32_1 : i32, i32, i32, i32
  }
  func.func @transform_1(%arg0: i32, %arg1: memref<8xi32, #tpu.memory_space<smem>>, %arg2: memref<32xi32, #tpu.memory_space<smem>>, %arg3: memref<32xi32, #tpu.memory_space<smem>>, %arg4: memref<32xi32, #tpu.memory_space<smem>>, %arg5: memref<32xi32, #tpu.memory_space<smem>>) -> (i32, i32, i32) {
    %c0_i32 = arith.constant 0 : i32
    %c0_i32_0 = arith.constant 0 : i32
    %c0_i32_1 = arith.constant 0 : i32
    return %arg0, %c0_i32, %c0_i32_0 : i32, i32, i32
  }
}

</mosaic_0001>

<llo_original>
// kernel: tpu_custom_call.1
$region0: #{tpu_custom_call.1}
  #allocation0 [shape = 'u32[]', space=smem, size = 0x4, offset = 0x4, fixed_abs, tag = 'smem constant byte address 0x4 - core index']
  #allocation1 [shape = 'u32[72,128]{1,0:T(1,128)}', space=vmem, size = 0x9000, scoped, tag = 'internal scratch']
  #allocation2 [shape = 's32[1]{0}', space=sflag, size = 0x4, scoped, tag = 'scoped memory for tpu_custom_call.1']
  #allocation3 [shape = 'u8[512]{0}', space=smem, size = 0x200, scoped, tag = 'prefetched SMEM operand 0']
  #allocation4 [shape = 'u8[512]{0}', space=smem, size = 0x200, scoped, tag = 'prefetched SMEM operand 1']
  #allocation5 [shape = 'u8[512]{0}', space=smem, size = 0x200, scoped, tag = 'prefetched SMEM operand 2']
  #allocation6 [shape = 'u8[512]{0}', space=smem, size = 0x200, scoped, tag = 'prefetched SMEM operand 3']
  #allocation7 [shape = 'u8[512]{0}', space=smem, size = 0x200, scoped, tag = 'prefetched SMEM operand 4']
  %s0 = inlined_call_operand.vmem [shape: s32[8], index: 0, kind: input, shape index: {}]
  %s1 = inlined_call_operand.vmem [shape: s32[32], index: 1, kind: input, shape index: {}]
  %s2 = inlined_call_operand.vmem [shape: s32[32], index: 2, kind: input, shape index: {}]
  %s3 = inlined_call_operand.vmem [shape: s32[32], index: 3, kind: input, shape index: {}]
  %s4 = inlined_call_operand.vmem [shape: s32[32], index: 4, kind: input, shape index: {}]
  %s5 = inlined_call_operand.vmem [shape: f32[2,16,16,8], index: 5, kind: input, shape index: {}]
  %s6 = inlined_call_operand.vmem [shape: bf16[8,16,8], index: 6, kind: output, shape index: {}]
  %s7 = sld [smem:[#allocation0]]
  $region37: #{tpu_custom_call.1} parent=0
    _
  %s9 = ssub.s32 1, %s7
  %s10 = scalar_select 0, %s9, %s7
  %s12 = sshll.u32 %s0, 4
  %s13 = int_to_ptr.vmem [resolvable:$true] %s12
  %15 = dma.vmem_to_smem %s13, 16, [#allocation3], [#allocation2]
  %s17 = sshll.u32 %s1, 4
  %s18 = int_to_ptr.vmem [resolvable:$true] %s17
  %20 = dma.vmem_to_smem %s18, 16, [#allocation4], [#allocation2]
  %s22 = sshll.u32 %s2, 4
  %s23 = int_to_ptr.vmem [resolvable:$true] %s22
  %25 = dma.vmem_to_smem %s23, 16, [#allocation5], [#allocation2]
  %s27 = sshll.u32 %s3, 4
  %s28 = int_to_ptr.vmem [resolvable:$true] %s27
  %30 = dma.vmem_to_smem %s28, 16, [#allocation6], [#allocation2]
  %s32 = sshll.u32 %s4, 4
  %s33 = int_to_ptr.vmem [resolvable:$true] %s32
  %35 = dma.vmem_to_smem %s33, 16, [#allocation7], [#allocation2]
  %37 = dma.done [#allocation2], 80
  %38 = sfence
  loop: start=0, step=1, limit=10
  $region2: #{tpu_custom_call.1} parent=0 // loop_pre_header
    _
  $region3: #{tpu_custom_call.1} parent=0 // loop_header
    %s40 = sphi 0, %s44
    %p41 = scmp.ge.s32.totalorder %s40, 10
    %s52 = sphi 0, %s54
    %s55 = sphi 0, %s52
    %s56 = sphi 0, %s55
    %s72 = sphi 0, %s56
    %s78 = sphi 0, %s80
    %s81 = sphi 0, %s78
    %s82 = sphi 0, %s81
    %s98 = sphi 0, %s82
  $region4: #{tpu_custom_call.1} parent=0 // loop_header_branch
    %43 = sbr.rel (%p41) target = $region8
  $region5: #{tpu_custom_call.1} parent=0 // loop_body
    %s45 = ssub.s32 %s40, 1
    %s46 = ssub.s32 %s40, 2
    %s47 = sadd.s32 %s40, 1
    %s48 = sld [smem:[#allocation3 + %s40]]
    %s49 = sld [smem:[#allocation3 + %s47]]
    %s50 = ssub.s32 %s48, %s49
    %p51 = scmp.eq.s32.totalorder %s50, 0
    %s53 = sadd.s32 %s52, 1
    %s54 = scalar_select %p51, %s52, %s53
    %p57 = pneg %p51
    %p58 = scmp.eq.s32.totalorder %s40, 7
    %p59 = por %p57, %p58
    %p60 = scmp.ne.s32.totalorder %s52, %s55
    %p61 = scmp.eq.s32.totalorder %s40, 0
    %p62 = por %p60, %p61
    %p63 = scmp.ne.s32.totalorder %s52, %s55
    %p64 = scmp.eq.s32.totalorder %s45, 7
    %p65 = por %p63, %p64
    %p66 = scmp.ne.s32.totalorder %s55, %s56
    %p67 = scmp.eq.s32.totalorder %s45, 0
    %p68 = por %p66, %p67
    %p69 = scmp.ne.s32.totalorder %s55, %s56
    %p70 = scmp.eq.s32.totalorder %s46, 7
    %p71 = por %p69, %p70
    %p73 = scmp.ne.s32.totalorder %s56, %s72
    %p74 = scmp.eq.s32.totalorder %s46, 0
    %p75 = por %p73, %p74
    %s76 = ssub.s32 %s40, %s47
    %p77 = scmp.eq.s32.totalorder %s76, 0
    %s79 = sadd.s32 %s78, 1
    %s80 = scalar_select %p77, %s78, %s79
    %p83 = pneg %p77
    %p84 = scmp.eq.s32.totalorder %s40, 7
    %p85 = por %p83, %p84
    %p86 = scmp.ne.s32.totalorder %s78, %s81
    %p87 = scmp.eq.s32.totalorder %s40, 0
    %p88 = por %p86, %p87
    %p89 = scmp.ne.s32.totalorder %s78, %s81
    %p90 = scmp.eq.s32.totalorder %s45, 7
    %p91 = por %p89, %p90
    %p92 = scmp.ne.s32.totalorder %s81, %s82
    %p93 = scmp.eq.s32.totalorder %s45, 0
    %p94 = por %p92, %p93
    %p95 = scmp.ne.s32.totalorder %s81, %s82
    %p96 = scmp.eq.s32.totalorder %s46, 7
    %p97 = por %p95, %p96
    %p99 = scmp.ne.s32.totalorder %s82, %s98
    %p100 = scmp.eq.s32.totalorder %s46, 0
    %p101 = por %p99, %p100
    %p102 = scmp.le.s32.totalorder 1, %s40
    %p103 = scmp.lt.s32.totalorder %s40, 9
    %p104 = pnand %p102, %p103
    %p105 = pneg %p104
    // Predicated region
    $region9: #{tpu_custom_call.1} parent=5 // pred_check
      _
    $region10: #{tpu_custom_call.1} parent=5 // pred_check_branch
      %107 = sbr.rel (%p104) target = $region12
    $region11: #{tpu_custom_call.1} parent=5 // pred_region
      %s108 = ssub.s32 %s40, 1
    $region12: #{tpu_custom_call.1} parent=5 // pred_fallthru
      _
    %p109 = scmp.lt.s32.totalorder %s40, 8
    // Predicated region
    $region13: #{tpu_custom_call.1} parent=5 // pred_check
      %p110 = pneg %p109
    $region14: #{tpu_custom_call.1} parent=5 // pred_check_branch
      %112 = sbr.rel (%p110) target = $region16
    $region15: #{tpu_custom_call.1} parent=5 // pred_region
      // Predicated region
      $region17: #{tpu_custom_call.1} parent=15 // pred_check
        %p113 = pneg %p62
      $region18: #{tpu_custom_call.1} parent=15 // pred_check_branch
        %115 = sbr.rel (%p113) target = $region20
      $region19: #{tpu_custom_call.1} parent=15 // pred_region
        %s116 = sld [smem:[#allocation3 + %s40]]
        %p117 = scmp.lt.s32.totalorder %s116, 1
        %s118 = scalar_select %p117, %s116, 1
        %s119 = smul.addr %s118, 32
        %s120 = smul.addr %s119, 8
        %s121 = scalar_lea.vmem %s5, %s120
        %s122 = sld [smem:[#allocation3 + %s40]]
      $region20: #{tpu_custom_call.1} parent=15 // pred_fallthru
        _
    $region16: #{tpu_custom_call.1} parent=5 // pred_fallthru
      _
    %p123 = scmp.le.s32.totalorder 1, %s40
    %p124 = scmp.lt.s32.totalorder %s40, 9
    %p125 = pnand %p123, %p124
    %p126 = pneg %p125
    // Predicated region
    $region21: #{tpu_custom_call.1} parent=5 // pred_check
      _
    $region22: #{tpu_custom_call.1} parent=5 // pred_check_branch
      %128 = sbr.rel (%p125) target = $region24
    $region23: #{tpu_custom_call.1} parent=5 // pred_region
      %s129 = ssub.s32 %s40, 1
      %s130 = sld [smem:[#allocation3 + %s45]]
      %p131 = scmp.lt.s32.totalorder %s130, 1
      %s132 = scalar_select %p131, %s130, 1
      %s133 = smul.addr %s132, 32
      %s134 = smul.addr %s133, 8
      %s135 = scalar_lea.vmem %s5, %s134
      %p136 = pneg %p68
      %p137 = pneg %p65
      %p138 = pneg %p94
      %p139 = pneg %p91
      %p140 = scmp.lt.s32.totalorder %s45, 7
      %s141 = scalar_select %p140, %s45, 7
      %s142 = smul.addr %s141, 2
      %s143 = smul.addr %s142, 4
      %s144 = scalar_lea.vmem %s6, %s143
      %s145 = sld [smem:[#allocation3 + %s45]]
      %p146 = scmp.lt.s32.totalorder %s145, 1
      %s147 = scalar_select %p146, %s145, 1
      %s148 = smul.addr %s147, 32
      %s149 = smul.addr %s148, 8
      %s150 = scalar_lea.vmem %s5, %s149
      %s151 = sld [smem:[#allocation3 + %s45]]
      %p152 = scmp.lt.s32.totalorder %s45, 7
      %s153 = scalar_select %p152, %s45, 7
      %s154 = smul.addr %s153, 2
      %s155 = smul.addr %s154, 4
      %s156 = scalar_lea.vmem %s6, %s155
      %v157 = vld [vmem:[%s150] sm:$0xff]
      %v158 = vld [vmem:[%s150 + $0x8] sm:$0xff]
      %v159 = vld [vmem:[%s150 + $0x10] sm:$0xff]
      %v160 = vld [vmem:[%s150 + $0x18] sm:$0xff]
      %v161 = vld [vmem:[%s150 + $0x20] sm:$0xff]
      %v162 = vld [vmem:[%s150 + $0x28] sm:$0xff]
      %v163 = vld [vmem:[%s150 + $0x30] sm:$0xff]
      %v164 = vld [vmem:[%s150 + $0x38] sm:$0xff]
      %v165 = vld [vmem:[%s150 + $0x40] sm:$0xff]
      %v166 = vld [vmem:[%s150 + $0x48] sm:$0xff]
      %v167 = vld [vmem:[%s150 + $0x50] sm:$0xff]
      %v168 = vld [vmem:[%s150 + $0x58] sm:$0xff]
      %v169 = vld [vmem:[%s150 + $0x60] sm:$0xff]
      %v170 = vld [vmem:[%s150 + $0x68] sm:$0xff]
      %v171 = vld [vmem:[%s150 + $0x70] sm:$0xff]
      %v172 = vld [vmem:[%s150 + $0x78] sm:$0xff]
      %v173 = vld [vmem:[%s150 + $0x80] sm:$0xff]
      %v174 = vld [vmem:[%s150 + $0x88] sm:$0xff]
      %v175 = vld [vmem:[%s150 + $0x90] sm:$0xff]
      %v176 = vld [vmem:[%s150 + $0x98] sm:$0xff]
      %v177 = vld [vmem:[%s150 + $0xa0] sm:$0xff]
      %v178 = vld [vmem:[%s150 + $0xa8] sm:$0xff]
      %v179 = vld [vmem:[%s150 + $0xb0] sm:$0xff]
      %v180 = vld [vmem:[%s150 + $0xb8] sm:$0xff]
      %v181 = vld [vmem:[%s150 + $0xc0] sm:$0xff]
      %v182 = vld [vmem:[%s150 + $0xc8] sm:$0xff]
      %v183 = vld [vmem:[%s150 + $0xd0] sm:$0xff]
      %v184 = vld [vmem:[%s150 + $0xd8] sm:$0xff]
      %v185 = vld [vmem:[%s150 + $0xe0] sm:$0xff]
      %v186 = vld [vmem:[%s150 + $0xe8] sm:$0xff]
      %v187 = vld [vmem:[%s150 + $0xf0] sm:$0xff]
      %v188 = vld [vmem:[%s150 + $0xf8] sm:$0xff]
      %v189 = vlaneseq
      %v190 = vshrl.u32 %v189, 7
      %v191 = vadd.s32 %v190, 8
      %s192 = smul.u32 %s45, 4
      %s193 = sld [smem:[#allocation6 + %s192]]
      %s194 = sld [smem:[#allocation7 + %s192]]
      %v195 = vstv %s193
      %vm196 = vcmp.ge.s32.totalorder %v190, %v195
      %vm197 = vcmp.ge.s32.totalorder %v191, %v195
      %v198 = vstv %s194
      %vm199 = vcmp.lt.s32.totalorder %v190, %v198
      %vm200 = vcmp.lt.s32.totalorder %v191, %v198
      %vm201 = vmand %vm196, %vm199
      %vm202 = vmand %vm197, %vm200
      %v203 = vsel %vm201, 1, 0
      %v204 = vsel %vm202, 1, 0
      %vm205 = vcmp.eq.s32.totalorder %v203, 1
      %vm206 = vcmp.eq.s32.totalorder %v204, 1
      %v207 = vsel %vm205, %v157, -3e+38
      %v208 = vsel %vm206, %v158, -3e+38
      %v209 = vsel %vm205, %v159, -3e+38
      %v210 = vsel %vm206, %v160, -3e+38
      %v211 = vsel %vm205, %v161, -3e+38
      %v212 = vsel %vm206, %v162, -3e+38
      %v213 = vsel %vm205, %v163, -3e+38
      %v214 = vsel %vm206, %v164, -3e+38
      %v215 = vsel %vm205, %v165, -3e+38
      %v216 = vsel %vm206, %v166, -3e+38
      %v217 = vsel %vm205, %v167, -3e+38
      %v218 = vsel %vm206, %v168, -3e+38
      %v219 = vsel %vm205, %v169, -3e+38
      %v220 = vsel %vm206, %v170, -3e+38
      %v221 = vsel %vm205, %v171, -3e+38
      %v222 = vsel %vm206, %v172, -3e+38
      %v223 = vsel %vm205, %v173, -3e+38
      %v224 = vsel %vm206, %v174, -3e+38
      %v225 = vsel %vm205, %v175, -3e+38
      %v226 = vsel %vm206, %v176, -3e+38
      %v227 = vsel %vm205, %v177, -3e+38
      %v228 = vsel %vm206, %v178, -3e+38
      %v229 = vsel %vm205, %v179, -3e+38
      %v230 = vsel %vm206, %v180, -3e+38
      %v231 = vsel %vm205, %v181, -3e+38
      %v232 = vsel %vm206, %v182, -3e+38
      %v233 = vsel %vm205, %v183, -3e+38
      %v234 = vsel %vm206, %v184, -3e+38
      %v235 = vsel %vm205, %v185, -3e+38
      %v236 = vsel %vm206, %v186, -3e+38
      %v237 = vsel %vm205, %v187, -3e+38
      %v238 = vsel %vm206, %v188, -3e+38
      %vm239 = vcmask 64512
      %v240 = vsel %vm239, %v207, -inf
      %v241 = vsel %vm239, %v208, -inf
      %v242 = vmax.f32 %v240, %v241
      %v243 = vrot.slane %v242, 4
      %v244 = vmax.f32 %v242, %v243
      %v245 = vrot.slane %v244, 2
      %v246 = vmax.f32 %v244, %v245
      %v247 = vrot.slane %v246, 1
      %v248 = vmax.f32 %v246, %v247
      %v249 = vsel %vm239, %v209, -inf
      %v250 = vsel %vm239, %v210, -inf
      %v251 = vmax.f32 %v249, %v250
      %v252 = vrot.slane %v251, 4
      %v253 = vmax.f32 %v251, %v252
      %v254 = vrot.slane %v253, 2
      %v255 = vmax.f32 %v253, %v254
      %v256 = vrot.slane %v255, 1
      %v257 = vmax.f32 %v255, %v256
      %v258 = vsel %vm239, %v211, -inf
      %v259 = vsel %vm239, %v212, -inf
      %v260 = vmax.f32 %v258, %v259
      %v261 = vrot.slane %v260, 4
      %v262 = vmax.f32 %v260, %v261
      %v263 = vrot.slane %v262, 2
      %v264 = vmax.f32 %v262, %v263
      %v265 = vrot.slane %v264, 1
      %v266 = vmax.f32 %v264, %v265
      %v267 = vsel %vm239, %v213, -inf
      %v268 = vsel %vm239, %v214, -inf
      %v269 = vmax.f32 %v267, %v268
      %v270 = vrot.slane %v269, 4
      %v271 = vmax.f32 %v269, %v270
      %v272 = vrot.slane %v271, 2
      %v273 = vmax.f32 %v271, %v272
      %v274 = vrot.slane %v273, 1
      %v275 = vmax.f32 %v273, %v274
      %v276 = vsel %vm239, %v215, -inf
      %v277 = vsel %vm239, %v216, -inf
      %v278 = vmax.f32 %v276, %v277
      %v279 = vrot.slane %v278, 4
      %v280 = vmax.f32 %v278, %v279
      %v281 = vrot.slane %v280, 2
      %v282 = vmax.f32 %v280, %v281
      %v283 = vrot.slane %v282, 1
      %v284 = vmax.f32 %v282, %v283
      %v285 = vsel %vm239, %v217, -inf
      %v286 = vsel %vm239, %v218, -inf
      %v287 = vmax.f32 %v285, %v286
      %v288 = vrot.slane %v287, 4
      %v289 = vmax.f32 %v287, %v288
      %v290 = vrot.slane %v289, 2
      %v291 = vmax.f32 %v289, %v290
      %v292 = vrot.slane %v291, 1
      %v293 = vmax.f32 %v291, %v292
      %v294 = vsel %vm239, %v219, -inf
      %v295 = vsel %vm239, %v220, -inf
      %v296 = vmax.f32 %v294, %v295
      %v297 = vrot.slane %v296, 4
      %v298 = vmax.f32 %v296, %v297
      %v299 = vrot.slane %v298, 2
      %v300 = vmax.f32 %v298, %v299
      %v301 = vrot.slane %v300, 1
      %v302 = vmax.f32 %v300, %v301
      %v303 = vsel %vm239, %v221, -inf
      %v304 = vsel %vm239, %v222, -inf
      %v305 = vmax.f32 %v303, %v304
      %v306 = vrot.slane %v305, 4
      %v307 = vmax.f32 %v305, %v306
      %v308 = vrot.slane %v307, 2
      %v309 = vmax.f32 %v307, %v308
      %v310 = vrot.slane %v309, 1
      %v311 = vmax.f32 %v309, %v310
      %v312 = vsel %vm239, %v223, -inf
      %v313 = vsel %vm239, %v224, -inf
      %v314 = vmax.f32 %v312, %v313
      %v315 = vrot.slane %v314, 4
      %v316 = vmax.f32 %v314, %v315
      %v317 = vrot.slane %v316, 2
      %v318 = vmax.f32 %v316, %v317
      %v319 = vrot.slane %v318, 1
      %v320 = vmax.f32 %v318, %v319
      %v321 = vsel %vm239, %v225, -inf
      %v322 = vsel %vm239, %v226, -inf
      %v323 = vmax.f32 %v321, %v322
      %v324 = vrot.slane %v323, 4
      %v325 = vmax.f32 %v323, %v324
      %v326 = vrot.slane %v325, 2
      %v327 = vmax.f32 %v325, %v326
      %v328 = vrot.slane %v327, 1
      %v329 = vmax.f32 %v327, %v328
      %v330 = vsel %vm239, %v227, -inf
      %v331 = vsel %vm239, %v228, -inf
      %v332 = vmax.f32 %v330, %v331
      %v333 = vrot.slane %v332, 4
      %v334 = vmax.f32 %v332, %v333
      %v335 = vrot.slane %v334, 2
      %v336 = vmax.f32 %v334, %v335
      %v337 = vrot.slane %v336, 1
      %v338 = vmax.f32 %v336, %v337
      %v339 = vsel %vm239, %v229, -inf
      %v340 = vsel %vm239, %v230, -inf
      %v341 = vmax.f32 %v339, %v340
      %v342 = vrot.slane %v341, 4
      %v343 = vmax.f32 %v341, %v342
      %v344 = vrot.slane %v343, 2
      %v345 = vmax.f32 %v343, %v344
      %v346 = vrot.slane %v345, 1
      %v347 = vmax.f32 %v345, %v346
      %v348 = vsel %vm239, %v231, -inf
      %v349 = vsel %vm239, %v232, -inf
      %v350 = vmax.f32 %v348, %v349
      %v351 = vrot.slane %v350, 4
      %v352 = vmax.f32 %v350, %v351
      %v353 = vrot.slane %v352, 2
      %v354 = vmax.f32 %v352, %v353
      %v355 = vrot.slane %v354, 1
      %v356 = vmax.f32 %v354, %v355
      %v357 = vsel %vm239, %v233, -inf
      %v358 = vsel %vm239, %v234, -inf
      %v359 = vmax.f32 %v357, %v358
      %v360 = vrot.slane %v359, 4
      %v361 = vmax.f32 %v359, %v360
      %v362 = vrot.slane %v361, 2
      %v363 = vmax.f32 %v361, %v362
      %v364 = vrot.slane %v363, 1
      %v365 = vmax.f32 %v363, %v364
      %v366 = vsel %vm239, %v235, -inf
      %v367 = vsel %vm239, %v236, -inf
      %v368 = vmax.f32 %v366, %v367
      %v369 = vrot.slane %v368, 4
      %v370 = vmax.f32 %v368, %v369
      %v371 = vrot.slane %v370, 2
      %v372 = vmax.f32 %v370, %v371
      %v373 = vrot.slane %v372, 1
      %v374 = vmax.f32 %v372, %v373
      %v375 = vsel %vm239, %v237, -inf
      %v376 = vsel %vm239, %v238, -inf
      %v377 = vmax.f32 %v375, %v376
      %v378 = vrot.slane %v377, 4
      %v379 = vmax.f32 %v377, %v378
      %v380 = vrot.slane %v379, 2
      %v381 = vmax.f32 %v379, %v380
      %v382 = vrot.slane %v381, 1
      %v383 = vmax.f32 %v381, %v382
      %s384 = sld [smem:[#allocation4 + %s192]]
      %s385 = sld [smem:[#allocation5 + %s192]]
      %v386 = vstv %s384
      %vm387 = vcmp.ge.s32.totalorder %v190, %v386
      %vm388 = vcmp.ge.s32.totalorder %v191, %v386
      %v389 = vstv %s385
      %vm390 = vcmp.lt.s32.totalorder %v190, %v389
      %vm391 = vcmp.lt.s32.totalorder %v191, %v389
      %vm392 = vmand %vm387, %vm390
      %vm393 = vmand %vm388, %vm391
      %v394 = vsel %vm392, 1, 0
      %v395 = vsel %vm393, 1, 0
      %vm396 = vcmp.eq.s32.totalorder %v394, 1
      %vm397 = vcmp.eq.s32.totalorder %v395, 1
      %vm414 = vcmask 1041409
      %v415 = vsel %vm414, %v257, %v248
      %vm416 = vcmask 1042434
      %v417 = vsel %vm416, %v266, %v415
      %vm418 = vcmask 1043459
      %v419 = vsel %vm418, %v275, %v417
      %vm420 = vcmask 1044484
      %v421 = vsel %vm420, %v284, %v419
      %vm422 = vcmask 1045509
      %v423 = vsel %vm422, %v293, %v421
      %vm424 = vcmask 1046534
      %v425 = vsel %vm424, %v302, %v423
      %vm426 = vcmask 1047559
      %v427 = vsel %vm426, %v311, %v425
      %v428 = vsel %vm414, %v329, %v320
      %v429 = vsel %vm416, %v338, %v428
      %v430 = vsel %vm418, %v347, %v429
      %v431 = vsel %vm420, %v356, %v430
      %v432 = vsel %vm422, %v365, %v431
      %v433 = vsel %vm424, %v374, %v432
      %v434 = vsel %vm426, %v383, %v433
      %v437 = vsel %vm396, %v427, -3e+38
      %v438 = vsel %vm397, %v434, -3e+38
      %v439 = vsel %vm239, %v437, -inf
      %v440 = vsel %vm239, %v438, -inf
      %v441 = vmax.f32 %v439, %v440
      %v442 = vrot.slane %v441, 4
      %v443 = vmax.f32 %v441, %v442
      %v444 = vrot.slane %v443, 2
      %v445 = vmax.f32 %v443, %v444
      %v446 = vrot.slane %v445, 1
      %v447 = vmax.f32 %v445, %v446
      %vm448 = vcmp.lt.f32.partialorder %v447, -1e+37
      %v449 = vsel %vm448, 0.0, %v447
      %s450 = sadd.s32 %s192, 1
      %s451 = sld [smem:[#allocation4 + %s450]]
      %s452 = sld [smem:[#allocation5 + %s450]]
      %v453 = vstv %s451
      %vm454 = vcmp.ge.s32.totalorder %v190, %v453
      %vm455 = vcmp.ge.s32.totalorder %v191, %v453
      %v456 = vstv %s452
      %vm457 = vcmp.lt.s32.totalorder %v190, %v456
      %vm458 = vcmp.lt.s32.totalorder %v191, %v456
      %vm459 = vmand %vm454, %vm457
      %vm460 = vmand %vm455, %vm458
      %v461 = vsel %vm459, 1, 0
      %v462 = vsel %vm460, 1, 0
      %vm463 = vcmp.eq.s32.totalorder %v461, 1
      %vm464 = vcmp.eq.s32.totalorder %v462, 1
      %v465 = vsel %vm463, %v427, -3e+38
      %v466 = vsel %vm464, %v434, -3e+38
      %v467 = vsel %vm239, %v465, -inf
      %v468 = vsel %vm239, %v466, -inf
      %v469 = vmax.f32 %v467, %v468
      %v470 = vrot.slane %v469, 4
      %v471 = vmax.f32 %v469, %v470
      %v472 = vrot.slane %v471, 2
      %v473 = vmax.f32 %v471, %v472
      %v474 = vrot.slane %v473, 1
      %v475 = vmax.f32 %v473, %v474
      %vm476 = vcmp.lt.f32.partialorder %v475, -1e+37
      %v477 = vsel %vm476, 0.0, %v475
      %s478 = sadd.s32 %s192, 2
      %s479 = sld [smem:[#allocation4 + %s478]]
      %s480 = sld [smem:[#allocation5 + %s478]]
      %v481 = vstv %s479
      %vm482 = vcmp.ge.s32.totalorder %v190, %v481
      %vm483 = vcmp.ge.s32.totalorder %v191, %v481
      %v484 = vstv %s480
      %vm485 = vcmp.lt.s32.totalorder %v190, %v484
      %vm486 = vcmp.lt.s32.totalorder %v191, %v484
      %vm487 = vmand %vm482, %vm485
      %vm488 = vmand %vm483, %vm486
      %v489 = vsel %vm487, 1, 0
      %v490 = vsel %vm488, 1, 0
      %vm491 = vcmp.eq.s32.totalorder %v489, 1
      %vm492 = vcmp.eq.s32.totalorder %v490, 1
      %v493 = vsel %vm491, %v427, -3e+38
      %v494 = vsel %vm492, %v434, -3e+38
      %v495 = vsel %vm239, %v493, -inf
      %v496 = vsel %vm239, %v494, -inf
      %v497 = vmax.f32 %v495, %v496
      %v498 = vrot.slane %v497, 4
      %v499 = vmax.f32 %v497, %v498
      %v500 = vrot.slane %v499, 2
      %v501 = vmax.f32 %v499, %v500
      %v502 = vrot.slane %v501, 1
      %v503 = vmax.f32 %v501, %v502
      %vm504 = vcmp.lt.f32.partialorder %v503, -1e+37
      %v505 = vsel %vm504, 0.0, %v503
      %s506 = sadd.s32 %s192, 3
      %s507 = sld [smem:[#allocation4 + %s506]]
      %s508 = sld [smem:[#allocation5 + %s506]]
      %v509 = vstv %s507
      %vm510 = vcmp.ge.s32.totalorder %v190, %v509
      %vm511 = vcmp.ge.s32.totalorder %v191, %v509
      %v512 = vstv %s508
      %vm513 = vcmp.lt.s32.totalorder %v190, %v512
      %vm514 = vcmp.lt.s32.totalorder %v191, %v512
      %vm515 = vmand %vm510, %vm513
      %vm516 = vmand %vm511, %vm514
      %v517 = vsel %vm515, 1, 0
      %v518 = vsel %vm516, 1, 0
      %vm519 = vcmp.eq.s32.totalorder %v517, 1
      %vm520 = vcmp.eq.s32.totalorder %v518, 1
      %v521 = vsel %vm519, %v427, -3e+38
      %v522 = vsel %vm520, %v434, -3e+38
      %v523 = vsel %vm239, %v521, -inf
      %v524 = vsel %vm239, %v522, -inf
      %v525 = vmax.f32 %v523, %v524
      %v526 = vrot.slane %v525, 4
      %v527 = vmax.f32 %v525, %v526
      %v528 = vrot.slane %v527, 2
      %v529 = vmax.f32 %v527, %v528
      %v530 = vrot.slane %v529, 1
      %v531 = vmax.f32 %v529, %v530
      %vm532 = vcmp.lt.f32.partialorder %v531, -1e+37
      %v533 = vsel %vm532, 0.0, %v531
      %vm534 = vcmask 1040384
      %v535 = vsel %vm534, %v449, %v477
      %vm536 = vcmask 1041408
      %v537 = vsel %vm536, %v535, %v505
      %vm538 = vcmask 1042432
      %v539 = vsel %vm538, %v537, %v533
      %v540 = vpack.c.bf16 %v539, %v539
      %vm541 = vcmask 58368
      %542 = vst.msk [vmem:[%s156] sm:$0x3] %vm541, %v540
      %s543 = sld [smem:[#allocation6 + %s450]]
      %s544 = sld [smem:[#allocation7 + %s450]]
      %v545 = vstv %s543
      %vm546 = vcmp.ge.s32.totalorder %v190, %v545
      %vm547 = vcmp.ge.s32.totalorder %v191, %v545
      %v548 = vstv %s544
      %vm549 = vcmp.lt.s32.totalorder %v190, %v548
      %vm550 = vcmp.lt.s32.totalorder %v191, %v548
      %vm551 = vmand %vm546, %vm549
      %vm552 = vmand %vm547, %vm550
      %v553 = vsel %vm551, 1, 0
      %v554 = vsel %vm552, 1, 0
      %vm555 = vcmp.eq.s32.totalorder %v553, 1
      %vm556 = vcmp.eq.s32.totalorder %v554, 1
      %v557 = vsel %vm555, %v157, -3e+38
      %v558 = vsel %vm556, %v158, -3e+38
      %v559 = vsel %vm555, %v159, -3e+38
      %v560 = vsel %vm556, %v160, -3e+38
      %v561 = vsel %vm555, %v161, -3e+38
      %v562 = vsel %vm556, %v162, -3e+38
      %v563 = vsel %vm555, %v163, -3e+38
      %v564 = vsel %vm556, %v164, -3e+38
      %v565 = vsel %vm555, %v165, -3e+38
      %v566 = vsel %vm556, %v166, -3e+38
      %v567 = vsel %vm555, %v167, -3e+38
      %v568 = vsel %vm556, %v168, -3e+38
      %v569 = vsel %vm555, %v169, -3e+38
      %v570 = vsel %vm556, %v170, -3e+38
      %v571 = vsel %vm555, %v171, -3e+38
      %v572 = vsel %vm556, %v172, -3e+38
      %v573 = vsel %vm555, %v173, -3e+38
      %v574 = vsel %vm556, %v174, -3e+38
      %v575 = vsel %vm555, %v175, -3e+38
      %v576 = vsel %vm556, %v176, -3e+38
      %v577 = vsel %vm555, %v177, -3e+38
      %v578 = vsel %vm556, %v178, -3e+38
      %v579 = vsel %vm555, %v179, -3e+38
      %v580 = vsel %vm556, %v180, -3e+38
      %v581 = vsel %vm555, %v181, -3e+38
      %v582 = vsel %vm556, %v182, -3e+38
      %v583 = vsel %vm555, %v183, -3e+38
      %v584 = vsel %vm556, %v184, -3e+38
      %v585 = vsel %vm555, %v185, -3e+38
      %v586 = vsel %vm556, %v186, -3e+38
      %v587 = vsel %vm555, %v187, -3e+38
      %v588 = vsel %vm556, %v188, -3e+38
      %v589 = vsel %vm239, %v557, -inf
      %v590 = vsel %vm239, %v558, -inf
      %v591 = vmax.f32 %v589, %v590
      %v592 = vrot.slane %v591, 4
      %v593 = vmax.f32 %v591, %v592
      %v594 = vrot.slane %v593, 2
      %v595 = vmax.f32 %v593, %v594
      %v596 = vrot.slane %v595, 1
      %v597 = vmax.f32 %v595, %v596
      %v598 = vsel %vm239, %v559, -inf
      %v599 = vsel %vm239, %v560, -inf
      %v600 = vmax.f32 %v598, %v599
      %v601 = vrot.slane %v600, 4
      %v602 = vmax.f32 %v600, %v601
      %v603 = vrot.slane %v602, 2
      %v604 = vmax.f32 %v602, %v603
      %v605 = vrot.slane %v604, 1
      %v606 = vmax.f32 %v604, %v605
      %v607 = vsel %vm239, %v561, -inf
      %v608 = vsel %vm239, %v562, -inf
      %v609 = vmax.f32 %v607, %v608
      %v610 = vrot.slane %v609, 4
      %v611 = vmax.f32 %v609, %v610
      %v612 = vrot.slane %v611, 2
      %v613 = vmax.f32 %v611, %v612
      %v614 = vrot.slane %v613, 1
      %v615 = vmax.f32 %v613, %v614
      %v616 = vsel %vm239, %v563, -inf
      %v617 = vsel %vm239, %v564, -inf
      %v618 = vmax.f32 %v616, %v617
      %v619 = vrot.slane %v618, 4
      %v620 = vmax.f32 %v618, %v619
      %v621 = vrot.slane %v620, 2
      %v622 = vmax.f32 %v620, %v621
      %v623 = vrot.slane %v622, 1
      %v624 = vmax.f32 %v622, %v623
      %v625 = vsel %vm239, %v565, -inf
      %v626 = vsel %vm239, %v566, -inf
      %v627 = vmax.f32 %v625, %v626
      %v628 = vrot.slane %v627, 4
      %v629 = vmax.f32 %v627, %v628
      %v630 = vrot.slane %v629, 2
      %v631 = vmax.f32 %v629, %v630
      %v632 = vrot.slane %v631, 1
      %v633 = vmax.f32 %v631, %v632
      %v634 = vsel %vm239, %v567, -inf
      %v635 = vsel %vm239, %v568, -inf
      %v636 = vmax.f32 %v634, %v635
      %v637 = vrot.slane %v636, 4
      %v638 = vmax.f32 %v636, %v637
      %v639 = vrot.slane %v638, 2
      %v640 = vmax.f32 %v638, %v639
      %v641 = vrot.slane %v640, 1
      %v642 = vmax.f32 %v640, %v641
      %v643 = vsel %vm239, %v569, -inf
      %v644 = vsel %vm239, %v570, -inf
      %v645 = vmax.f32 %v643, %v644
      %v646 = vrot.slane %v645, 4
      %v647 = vmax.f32 %v645, %v646
      %v648 = vrot.slane %v647, 2
      %v649 = vmax.f32 %v647, %v648
      %v650 = vrot.slane %v649, 1
      %v651 = vmax.f32 %v649, %v650
      %v652 = vsel %vm239, %v571, -inf
      %v653 = vsel %vm239, %v572, -inf
      %v654 = vmax.f32 %v652, %v653
      %v655 = vrot.slane %v654, 4
      %v656 = vmax.f32 %v654, %v655
      %v657 = vrot.slane %v656, 2
      %v658 = vmax.f32 %v656, %v657
      %v659 = vrot.slane %v658, 1
      %v660 = vmax.f32 %v658, %v659
      %v661 = vsel %vm239, %v573, -inf
      %v662 = vsel %vm239, %v574, -inf
      %v663 = vmax.f32 %v661, %v662
      %v664 = vrot.slane %v663, 4
      %v665 = vmax.f32 %v663, %v664
      %v666 = vrot.slane %v665, 2
      %v667 = vmax.f32 %v665, %v666
      %v668 = vrot.slane %v667, 1
      %v669 = vmax.f32 %v667, %v668
      %v670 = vsel %vm239, %v575, -inf
      %v671 = vsel %vm239, %v576, -inf
      %v672 = vmax.f32 %v670, %v671
      %v673 = vrot.slane %v672, 4
      %v674 = vmax.f32 %v672, %v673
      %v675 = vrot.slane %v674, 2
      %v676 = vmax.f32 %v674, %v675
      %v677 = vrot.slane %v676, 1
      %v678 = vmax.f32 %v676, %v677
      %v679 = vsel %vm239, %v577, -inf
      %v680 = vsel %vm239, %v578, -inf
      %v681 = vmax.f32 %v679, %v680
      %v682 = vrot.slane %v681, 4
      %v683 = vmax.f32 %v681, %v682
      %v684 = vrot.slane %v683, 2
      %v685 = vmax.f32 %v683, %v684
      %v686 = vrot.slane %v685, 1
      %v687 = vmax.f32 %v685, %v686
      %v688 = vsel %vm239, %v579, -inf
      %v689 = vsel %vm239, %v580, -inf
      %v690 = vmax.f32 %v688, %v689
      %v691 = vrot.slane %v690, 4
      %v692 = vmax.f32 %v690, %v691
      %v693 = vrot.slane %v692, 2
      %v694 = vmax.f32 %v692, %v693
      %v695 = vrot.slane %v694, 1
      %v696 = vmax.f32 %v694, %v695
      %v697 = vsel %vm239, %v581, -inf
      %v698 = vsel %vm239, %v582, -inf
      %v699 = vmax.f32 %v697, %v698
      %v700 = vrot.slane %v699, 4
      %v701 = vmax.f32 %v699, %v700
      %v702 = vrot.slane %v701, 2
      %v703 = vmax.f32 %v701, %v702
      %v704 = vrot.slane %v703, 1
      %v705 = vmax.f32 %v703, %v704
      %v706 = vsel %vm239, %v583, -inf
      %v707 = vsel %vm239, %v584, -inf
      %v708 = vmax.f32 %v706, %v707
      %v709 = vrot.slane %v708, 4
      %v710 = vmax.f32 %v708, %v709
      %v711 = vrot.slane %v710, 2
      %v712 = vmax.f32 %v710, %v711
      %v713 = vrot.slane %v712, 1
      %v714 = vmax.f32 %v712, %v713
      %v715 = vsel %vm239, %v585, -inf
      %v716 = vsel %vm239, %v586, -inf
      %v717 = vmax.f32 %v715, %v716
      %v718 = vrot.slane %v717, 4
      %v719 = vmax.f32 %v717, %v718
      %v720 = vrot.slane %v719, 2
      %v721 = vmax.f32 %v719, %v720
      %v722 = vrot.slane %v721, 1
      %v723 = vmax.f32 %v721, %v722
      %v724 = vsel %vm239, %v587, -inf
      %v725 = vsel %vm239, %v588, -inf
      %v726 = vmax.f32 %v724, %v725
      %v727 = vrot.slane %v726, 4
      %v728 = vmax.f32 %v726, %v727
      %v729 = vrot.slane %v728, 2
      %v730 = vmax.f32 %v728, %v729
      %v731 = vrot.slane %v730, 1
      %v732 = vmax.f32 %v730, %v731
      %s733 = sld [smem:[#allocation4 + %s192]]
      %s734 = sld [smem:[#allocation5 + %s192]]
      %v735 = vstv %s733
      %vm736 = vcmp.ge.s32.totalorder %v190, %v735
      %vm737 = vcmp.ge.s32.totalorder %v191, %v735
      %v738 = vstv %s734
      %vm739 = vcmp.lt.s32.totalorder %v190, %v738
      %vm740 = vcmp.lt.s32.totalorder %v191, %v738
      %vm741 = vmand %vm736, %vm739
      %vm742 = vmand %vm737, %vm740
      %v743 = vsel %vm741, 1, 0
      %v744 = vsel %vm742, 1, 0
      %vm745 = vcmp.eq.s32.totalorder %v743, 1
      %vm746 = vcmp.eq.s32.totalorder %v744, 1
      %v763 = vsel %vm414, %v606, %v597
      %v764 = vsel %vm416, %v615, %v763
      %v765 = vsel %vm418, %v624, %v764
      %v766 = vsel %vm420, %v633, %v765
      %v767 = vsel %vm422, %v642, %v766
      %v768 = vsel %vm424, %v651, %v767
      %v769 = vsel %vm426, %v660, %v768
      %v770 = vsel %vm414, %v678, %v669
      %v771 = vsel %vm416, %v687, %v770
      %v772 = vsel %vm418, %v696, %v771
      %v773 = vsel %vm420, %v705, %v772
      %v774 = vsel %vm422, %v714, %v773
      %v775 = vsel %vm424, %v723, %v774
      %v776 = vsel %vm426, %v732, %v775
      %v779 = vsel %vm745, %v769, -3e+38
      %v780 = vsel %vm746, %v776, -3e+38
      %v781 = vsel %vm239, %v779, -inf
      %v782 = vsel %vm239, %v780, -inf
      %v783 = vmax.f32 %v781, %v782
      %v784 = vrot.slane %v783, 4
      %v785 = vmax.f32 %v783, %v784
      %v786 = vrot.slane %v785, 2
      %v787 = vmax.f32 %v785, %v786
      %v788 = vrot.slane %v787, 1
      %v789 = vmax.f32 %v787, %v788
      %vm790 = vcmp.lt.f32.partialorder %v789, -1e+37
      %v791 = vsel %vm790, 0.0, %v789
      %s792 = sld [smem:[#allocation4 + %s450]]
      %s793 = sld [smem:[#allocation5 + %s450]]
      %v794 = vstv %s792
      %vm795 = vcmp.ge.s32.totalorder %v190, %v794
      %vm796 = vcmp.ge.s32.totalorder %v191, %v794
      %v797 = vstv %s793
      %vm798 = vcmp.lt.s32.totalorder %v190, %v797
      %vm799 = vcmp.lt.s32.totalorder %v191, %v797
      %vm800 = vmand %vm795, %vm798
      %vm801 = vmand %vm796, %vm799
      %v802 = vsel %vm800, 1, 0
      %v803 = vsel %vm801, 1, 0
      %vm804 = vcmp.eq.s32.totalorder %v802, 1
      %vm805 = vcmp.eq.s32.totalorder %v803, 1
      %v806 = vsel %vm804, %v769, -3e+38
      %v807 = vsel %vm805, %v776, -3e+38
      %v808 = vsel %vm239, %v806, -inf
      %v809 = vsel %vm239, %v807, -inf
      %v810 = vmax.f32 %v808, %v809
      %v811 = vrot.slane %v810, 4
      %v812 = vmax.f32 %v810, %v811
      %v813 = vrot.slane %v812, 2
      %v814 = vmax.f32 %v812, %v813
      %v815 = vrot.slane %v814, 1
      %v816 = vmax.f32 %v814, %v815
      %vm817 = vcmp.lt.f32.partialorder %v816, -1e+37
      %v818 = vsel %vm817, 0.0, %v816
      %s819 = sld [smem:[#allocation4 + %s478]]
      %s820 = sld [smem:[#allocation5 + %s478]]
      %v821 = vstv %s819
      %vm822 = vcmp.ge.s32.totalorder %v190, %v821
      %vm823 = vcmp.ge.s32.totalorder %v191, %v821
      %v824 = vstv %s820
      %vm825 = vcmp.lt.s32.totalorder %v190, %v824
      %vm826 = vcmp.lt.s32.totalorder %v191, %v824
      %vm827 = vmand %vm822, %vm825
      %vm828 = vmand %vm823, %vm826
      %v829 = vsel %vm827, 1, 0
      %v830 = vsel %vm828, 1, 0
      %vm831 = vcmp.eq.s32.totalorder %v829, 1
      %vm832 = vcmp.eq.s32.totalorder %v830, 1
      %v833 = vsel %vm831, %v769, -3e+38
      %v834 = vsel %vm832, %v776, -3e+38
      %v835 = vsel %vm239, %v833, -inf
      %v836 = vsel %vm239, %v834, -inf
      %v837 = vmax.f32 %v835, %v836
      %v838 = vrot.slane %v837, 4
      %v839 = vmax.f32 %v837, %v838
      %v840 = vrot.slane %v839, 2
      %v841 = vmax.f32 %v839, %v840
      %v842 = vrot.slane %v841, 1
      %v843 = vmax.f32 %v841, %v842
      %vm844 = vcmp.lt.f32.partialorder %v843, -1e+37
      %v845 = vsel %vm844, 0.0, %v843
      %s846 = sld [smem:[#allocation4 + %s506]]
      %s847 = sld [smem:[#allocation5 + %s506]]
      %v848 = vstv %s846
      %vm849 = vcmp.ge.s32.totalorder %v190, %v848
      %vm850 = vcmp.ge.s32.totalorder %v191, %v848
      %v851 = vstv %s847
      %vm852 = vcmp.lt.s32.totalorder %v190, %v851
      %vm853 = vcmp.lt.s32.totalorder %v191, %v851
      %vm854 = vmand %vm849, %vm852
      %vm855 = vmand %vm850, %vm853
      %v856 = vsel %vm854, 1, 0
      %v857 = vsel %vm855, 1, 0
      %vm858 = vcmp.eq.s32.totalorder %v856, 1
      %vm859 = vcmp.eq.s32.totalorder %v857, 1
      %v860 = vsel %vm858, %v769, -3e+38
      %v861 = vsel %vm859, %v776, -3e+38
      %v862 = vsel %vm239, %v860, -inf
      %v863 = vsel %vm239, %v861, -inf
      %v864 = vmax.f32 %v862, %v863
      %v865 = vrot.slane %v864, 4
      %v866 = vmax.f32 %v864, %v865
      %v867 = vrot.slane %v866, 2
      %v868 = vmax.f32 %v866, %v867
      %v869 = vrot.slane %v868, 1
      %v870 = vmax.f32 %v868, %v869
      %vm871 = vcmp.lt.f32.partialorder %v870, -1e+37
      %v872 = vsel %vm871, 0.0, %v870
      %v873 = vsel %vm534, %v791, %v818
      %v874 = vsel %vm536, %v873, %v845
      %v875 = vsel %vm538, %v874, %v872
      %v876 = vpack.c.bf16 %v875, %v875
      %v878 = vrot.slane %v876, 6
      %vm880 = vcmask 60418
      %881 = vst.msk [vmem:[%s156] sm:$0xc] %vm880, %v878
      %s882 = sld [smem:[#allocation6 + %s478]]
      %s883 = sld [smem:[#allocation7 + %s478]]
      %v884 = vstv %s882
      %vm885 = vcmp.ge.s32.totalorder %v190, %v884
      %vm886 = vcmp.ge.s32.totalorder %v191, %v884
      %v887 = vstv %s883
      %vm888 = vcmp.lt.s32.totalorder %v190, %v887
      %vm889 = vcmp.lt.s32.totalorder %v191, %v887
      %vm890 = vmand %vm885, %vm888
      %vm891 = vmand %vm886, %vm889
      %v892 = vsel %vm890, 1, 0
      %v893 = vsel %vm891, 1, 0
      %vm894 = vcmp.eq.s32.totalorder %v892, 1
      %vm895 = vcmp.eq.s32.totalorder %v893, 1
      %v896 = vsel %vm894, %v157, -3e+38
      %v897 = vsel %vm895, %v158, -3e+38
      %v898 = vsel %vm894, %v159, -3e+38
      %v899 = vsel %vm895, %v160, -3e+38
      %v900 = vsel %vm894, %v161, -3e+38
      %v901 = vsel %vm895, %v162, -3e+38
      %v902 = vsel %vm894, %v163, -3e+38
      %v903 = vsel %vm895, %v164, -3e+38
      %v904 = vsel %vm894, %v165, -3e+38
      %v905 = vsel %vm895, %v166, -3e+38
      %v906 = vsel %vm894, %v167, -3e+38
      %v907 = vsel %vm895, %v168, -3e+38
      %v908 = vsel %vm894, %v169, -3e+38
      %v909 = vsel %vm895, %v170, -3e+38
      %v910 = vsel %vm894, %v171, -3e+38
      %v911 = vsel %vm895, %v172, -3e+38
      %v912 = vsel %vm894, %v173, -3e+38
      %v913 = vsel %vm895, %v174, -3e+38
      %v914 = vsel %vm894, %v175, -3e+38
      %v915 = vsel %vm895, %v176, -3e+38
      %v916 = vsel %vm894, %v177, -3e+38
      %v917 = vsel %vm895, %v178, -3e+38
      %v918 = vsel %vm894, %v179, -3e+38
      %v919 = vsel %vm895, %v180, -3e+38
      %v920 = vsel %vm894, %v181, -3e+38
      %v921 = vsel %vm895, %v182, -3e+38
      %v922 = vsel %vm894, %v183, -3e+38
      %v923 = vsel %vm895, %v184, -3e+38
      %v924 = vsel %vm894, %v185, -3e+38
      %v925 = vsel %vm895, %v186, -3e+38
      %v926 = vsel %vm894, %v187, -3e+38
      %v927 = vsel %vm895, %v188, -3e+38
      %v928 = vsel %vm239, %v896, -inf
      %v929 = vsel %vm239, %v897, -inf
      %v930 = vmax.f32 %v928, %v929
      %v931 = vrot.slane %v930, 4
      %v932 = vmax.f32 %v930, %v931
      %v933 = vrot.slane %v932, 2
      %v934 = vmax.f32 %v932, %v933
      %v935 = vrot.slane %v934, 1
      %v936 = vmax.f32 %v934, %v935
      %v937 = vsel %vm239, %v898, -inf
      %v938 = vsel %vm239, %v899, -inf
      %v939 = vmax.f32 %v937, %v938
      %v940 = vrot.slane %v939, 4
      %v941 = vmax.f32 %v939, %v940
      %v942 = vrot.slane %v941, 2
      %v943 = vmax.f32 %v941, %v942
      %v944 = vrot.slane %v943, 1
      %v945 = vmax.f32 %v943, %v944
      %v946 = vsel %vm239, %v900, -inf
      %v947 = vsel %vm239, %v901, -inf
      %v948 = vmax.f32 %v946, %v947
      %v949 = vrot.slane %v948, 4
      %v950 = vmax.f32 %v948, %v949
      %v951 = vrot.slane %v950, 2
      %v952 = vmax.f32 %v950, %v951
      %v953 = vrot.slane %v952, 1
      %v954 = vmax.f32 %v952, %v953
      %v955 = vsel %vm239, %v902, -inf
      %v956 = vsel %vm239, %v903, -inf
      %v957 = vmax.f32 %v955, %v956
      %v958 = vrot.slane %v957, 4
      %v959 = vmax.f32 %v957, %v958
      %v960 = vrot.slane %v959, 2
      %v961 = vmax.f32 %v959, %v960
      %v962 = vrot.slane %v961, 1
      %v963 = vmax.f32 %v961, %v962
      %v964 = vsel %vm239, %v904, -inf
      %v965 = vsel %vm239, %v905, -inf
      %v966 = vmax.f32 %v964, %v965
      %v967 = vrot.slane %v966, 4
      %v968 = vmax.f32 %v966, %v967
      %v969 = vrot.slane %v968, 2
      %v970 = vmax.f32 %v968, %v969
      %v971 = vrot.slane %v970, 1
      %v972 = vmax.f32 %v970, %v971
      %v973 = vsel %vm239, %v906, -inf
      %v974 = vsel %vm239, %v907, -inf
      %v975 = vmax.f32 %v973, %v974
      %v976 = vrot.slane %v975, 4
      %v977 = vmax.f32 %v975, %v976
      %v978 = vrot.slane %v977, 2
      %v979 = vmax.f32 %v977, %v978
      %v980 = vrot.slane %v979, 1
      %v981 = vmax.f32 %v979, %v980
      %v982 = vsel %vm239, %v908, -inf
      %v983 = vsel %vm239, %v909, -inf
      %v984 = vmax.f32 %v982, %v983
      %v985 = vrot.slane %v984, 4
      %v986 = vmax.f32 %v984, %v985
      %v987 = vrot.slane %v986, 2
      %v988 = vmax.f32 %v986, %v987
      %v989 = vrot.slane %v988, 1
      %v990 = vmax.f32 %v988, %v989
      %v991 = vsel %vm239, %v910, -inf
      %v992 = vsel %vm239, %v911, -inf
      %v993 = vmax.f32 %v991, %v992
      %v994 = vrot.slane %v993, 4
      %v995 = vmax.f32 %v993, %v994
      %v996 = vrot.slane %v995, 2
      %v997 = vmax.f32 %v995, %v996
      %v998 = vrot.slane %v997, 1
      %v999 = vmax.f32 %v997, %v998
      %v1000 = vsel %vm239, %v912, -inf
      %v1001 = vsel %vm239, %v913, -inf
      %v1002 = vmax.f32 %v1000, %v1001
      %v1003 = vrot.slane %v1002, 4
      %v1004 = vmax.f32 %v1002, %v1003
      %v1005 = vrot.slane %v1004, 2
      %v1006 = vmax.f32 %v1004, %v1005
      %v1007 = vrot.slane %v1006, 1
      %v1008 = vmax.f32 %v1006, %v1007
      %v1009 = vsel %vm239, %v914, -inf
      %v1010 = vsel %vm239, %v915, -inf
      %v1011 = vmax.f32 %v1009, %v1010
      %v1012 = vrot.slane %v1011, 4
      %v1013 = vmax.f32 %v1011, %v1012
      %v1014 = vrot.slane %v1013, 2
      %v1015 = vmax.f32 %v1013, %v1014
      %v1016 = vrot.slane %v1015, 1
      %v1017 = vmax.f32 %v1015, %v1016
      %v1018 = vsel %vm239, %v916, -inf
      %v1019 = vsel %vm239, %v917, -inf
      %v1020 = vmax.f32 %v1018, %v1019
      %v1021 = vrot.slane %v1020, 4
      %v1022 = vmax.f32 %v1020, %v1021
      %v1023 = vrot.slane %v1022, 2
      %v1024 = vmax.f32 %v1022, %v1023
      %v1025 = vrot.slane %v1024, 1
      %v1026 = vmax.f32 %v1024, %v1025
      %v1027 = vsel %vm239, %v918, -inf
      %v1028 = vsel %vm239, %v919, -inf
      %v1029 = vmax.f32 %v1027, %v1028
      %v1030 = vrot.slane %v1029, 4
      %v1031 = vmax.f32 %v1029, %v1030
      %v1032 = vrot.slane %v1031, 2
      %v1033 = vmax.f32 %v1031, %v1032
      %v1034 = vrot.slane %v1033, 1
      %v1035 = vmax.f32 %v1033, %v1034
      %v1036 = vsel %vm239, %v920, -inf
      %v1037 = vsel %vm239, %v921, -inf
      %v1038 = vmax.f32 %v1036, %v1037
      %v1039 = vrot.slane %v1038, 4
      %v1040 = vmax.f32 %v1038, %v1039
      %v1041 = vrot.slane %v1040, 2
      %v1042 = vmax.f32 %v1040, %v1041
      %v1043 = vrot.slane %v1042, 1
      %v1044 = vmax.f32 %v1042, %v1043
      %v1045 = vsel %vm239, %v922, -inf
      %v1046 = vsel %vm239, %v923, -inf
      %v1047 = vmax.f32 %v1045, %v1046
      %v1048 = vrot.slane %v1047, 4
      %v1049 = vmax.f32 %v1047, %v1048
      %v1050 = vrot.slane %v1049, 2
      %v1051 = vmax.f32 %v1049, %v1050
      %v1052 = vrot.slane %v1051, 1
      %v1053 = vmax.f32 %v1051, %v1052
      %v1054 = vsel %vm239, %v924, -inf
      %v1055 = vsel %vm239, %v925, -inf
      %v1056 = vmax.f32 %v1054, %v1055
      %v1057 = vrot.slane %v1056, 4
      %v1058 = vmax.f32 %v1056, %v1057
      %v1059 = vrot.slane %v1058, 2
      %v1060 = vmax.f32 %v1058, %v1059
      %v1061 = vrot.slane %v1060, 1
      %v1062 = vmax.f32 %v1060, %v1061
      %v1063 = vsel %vm239, %v926, -inf
      %v1064 = vsel %vm239, %v927, -inf
      %v1065 = vmax.f32 %v1063, %v1064
      %v1066 = vrot.slane %v1065, 4
      %v1067 = vmax.f32 %v1065, %v1066
      %v1068 = vrot.slane %v1067, 2
      %v1069 = vmax.f32 %v1067, %v1068
      %v1070 = vrot.slane %v1069, 1
      %v1071 = vmax.f32 %v1069, %v1070
      %s1072 = sld [smem:[#allocation4 + %s192]]
      %s1073 = sld [smem:[#allocation5 + %s192]]
      %v1074 = vstv %s1072
      %vm1075 = vcmp.ge.s32.totalorder %v190, %v1074
      %vm1076 = vcmp.ge.s32.totalorder %v191, %v1074
      %v1077 = vstv %s1073
      %vm1078 = vcmp.lt.s32.totalorder %v190, %v1077
      %vm1079 = vcmp.lt.s32.totalorder %v191, %v1077
      %vm1080 = vmand %vm1075, %vm1078
      %vm1081 = vmand %vm1076, %vm1079
      %v1082 = vsel %vm1080, 1, 0
      %v1083 = vsel %vm1081, 1, 0
      %vm1084 = vcmp.eq.s32.totalorder %v1082, 1
      %vm1085 = vcmp.eq.s32.totalorder %v1083, 1
      %v1102 = vsel %vm414, %v945, %v936
      %v1103 = vsel %vm416, %v954, %v1102
      %v1104 = vsel %vm418, %v963, %v1103
      %v1105 = vsel %vm420, %v972, %v1104
      %v1106 = vsel %vm422, %v981, %v1105
      %v1107 = vsel %vm424, %v990, %v1106
      %v1108 = vsel %vm426, %v999, %v1107
      %v1109 = vsel %vm414, %v1017, %v1008
      %v1110 = vsel %vm416, %v1026, %v1109
      %v1111 = vsel %vm418, %v1035, %v1110
      %v1112 = vsel %vm420, %v1044, %v1111
      %v1113 = vsel %vm422, %v1053, %v1112
      %v1114 = vsel %vm424, %v1062, %v1113
      %v1115 = vsel %vm426, %v1071, %v1114
      %v1118 = vsel %vm1084, %v1108, -3e+38
      %v1119 = vsel %vm1085, %v1115, -3e+38
      %v1120 = vsel %vm239, %v1118, -inf
      %v1121 = vsel %vm239, %v1119, -inf
      %v1122 = vmax.f32 %v1120, %v1121
      %v1123 = vrot.slane %v1122, 4
      %v1124 = vmax.f32 %v1122, %v1123
      %v1125 = vrot.slane %v1124, 2
      %v1126 = vmax.f32 %v1124, %v1125
      %v1127 = vrot.slane %v1126, 1
      %v1128 = vmax.f32 %v1126, %v1127
      %vm1129 = vcmp.lt.f32.partialorder %v1128, -1e+37
      %v1130 = vsel %vm1129, 0.0, %v1128
      %s1131 = sld [smem:[#allocation4 + %s450]]
      %s1132 = sld [smem:[#allocation5 + %s450]]
      %v1133 = vstv %s1131
      %vm1134 = vcmp.ge.s32.totalorder %v190, %v1133
      %vm1135 = vcmp.ge.s32.totalorder %v191, %v1133
      %v1136 = vstv %s1132
      %vm1137 = vcmp.lt.s32.totalorder %v190, %v1136
      %vm1138 = vcmp.lt.s32.totalorder %v191, %v1136
      %vm1139 = vmand %vm1134, %vm1137
      %vm1140 = vmand %vm1135, %vm1138
      %v1141 = vsel %vm1139, 1, 0
      %v1142 = vsel %vm1140, 1, 0
      %vm1143 = vcmp.eq.s32.totalorder %v1141, 1
      %vm1144 = vcmp.eq.s32.totalorder %v1142, 1
      %v1145 = vsel %vm1143, %v1108, -3e+38
      %v1146 = vsel %vm1144, %v1115, -3e+38
      %v1147 = vsel %vm239, %v1145, -inf
      %v1148 = vsel %vm239, %v1146, -inf
      %v1149 = vmax.f32 %v1147, %v1148
      %v1150 = vrot.slane %v1149, 4
      %v1151 = vmax.f32 %v1149, %v1150
      %v1152 = vrot.slane %v1151, 2
      %v1153 = vmax.f32 %v1151, %v1152
      %v1154 = vrot.slane %v1153, 1
      %v1155 = vmax.f32 %v1153, %v1154
      %vm1156 = vcmp.lt.f32.partialorder %v1155, -1e+37
      %v1157 = vsel %vm1156, 0.0, %v1155
      %s1158 = sld [smem:[#allocation4 + %s478]]
      %s1159 = sld [smem:[#allocation5 + %s478]]
      %v1160 = vstv %s1158
      %vm1161 = vcmp.ge.s32.totalorder %v190, %v1160
      %vm1162 = vcmp.ge.s32.totalorder %v191, %v1160
      %v1163 = vstv %s1159
      %vm1164 = vcmp.lt.s32.totalorder %v190, %v1163
      %vm1165 = vcmp.lt.s32.totalorder %v191, %v1163
      %vm1166 = vmand %vm1161, %vm1164
      %vm1167 = vmand %vm1162, %vm1165
      %v1168 = vsel %vm1166, 1, 0
      %v1169 = vsel %vm1167, 1, 0
      %vm1170 = vcmp.eq.s32.totalorder %v1168, 1
      %vm1171 = vcmp.eq.s32.totalorder %v1169, 1
      %v1172 = vsel %vm1170, %v1108, -3e+38
      %v1173 = vsel %vm1171, %v1115, -3e+38
      %v1174 = vsel %vm239, %v1172, -inf
      %v1175 = vsel %vm239, %v1173, -inf
      %v1176 = vmax.f32 %v1174, %v1175
      %v1177 = vrot.slane %v1176, 4
      %v1178 = vmax.f32 %v1176, %v1177
      %v1179 = vrot.slane %v1178, 2
      %v1180 = vmax.f32 %v1178, %v1179
      %v1181 = vrot.slane %v1180, 1
      %v1182 = vmax.f32 %v1180, %v1181
      %vm1183 = vcmp.lt.f32.partialorder %v1182, -1e+37
      %v1184 = vsel %vm1183, 0.0, %v1182
      %s1185 = sld [smem:[#allocation4 + %s506]]
      %s1186 = sld [smem:[#allocation5 + %s506]]
      %v1187 = vstv %s1185
      %vm1188 = vcmp.ge.s32.totalorder %v190, %v1187
      %vm1189 = vcmp.ge.s32.totalorder %v191, %v1187
      %v1190 = vstv %s1186
      %vm1191 = vcmp.lt.s32.totalorder %v190, %v1190
      %vm1192 = vcmp.lt.s32.totalorder %v191, %v1190
      %vm1193 = vmand %vm1188, %vm1191
      %vm1194 = vmand %vm1189, %vm1192
      %v1195 = vsel %vm1193, 1, 0
      %v1196 = vsel %vm1194, 1, 0
      %vm1197 = vcmp.eq.s32.totalorder %v1195, 1
      %vm1198 = vcmp.eq.s32.totalorder %v1196, 1
      %v1199 = vsel %vm1197, %v1108, -3e+38
      %v1200 = vsel %vm1198, %v1115, -3e+38
      %v1201 = vsel %vm239, %v1199, -inf
      %v1202 = vsel %vm239, %v1200, -inf
      %v1203 = vmax.f32 %v1201, %v1202
      %v1204 = vrot.slane %v1203, 4
      %v1205 = vmax.f32 %v1203, %v1204
      %v1206 = vrot.slane %v1205, 2
      %v1207 = vmax.f32 %v1205, %v1206
      %v1208 = vrot.slane %v1207, 1
      %v1209 = vmax.f32 %v1207, %v1208
      %vm1210 = vcmp.lt.f32.partialorder %v1209, -1e+37
      %v1211 = vsel %vm1210, 0.0, %v1209
      %v1212 = vsel %vm534, %v1130, %v1157
      %v1213 = vsel %vm536, %v1212, %v1184
      %v1214 = vsel %vm538, %v1213, %v1211
      %v1215 = vpack.c.bf16 %v1214, %v1214
      %1216 = vst.msk [vmem:[%s156 + $0x4] sm:$0x3] %vm541, %v1215
      %s1217 = sld [smem:[#allocation6 + %s506]]
      %s1218 = sld [smem:[#allocation7 + %s506]]
      %v1219 = vstv %s1217
      %vm1220 = vcmp.ge.s32.totalorder %v190, %v1219
      %vm1221 = vcmp.ge.s32.totalorder %v191, %v1219
      %v1222 = vstv %s1218
      %vm1223 = vcmp.lt.s32.totalorder %v190, %v1222
      %vm1224 = vcmp.lt.s32.totalorder %v191, %v1222
      %vm1225 = vmand %vm1220, %vm1223
      %vm1226 = vmand %vm1221, %vm1224
      %v1227 = vsel %vm1225, 1, 0
      %v1228 = vsel %vm1226, 1, 0
      %vm1229 = vcmp.eq.s32.totalorder %v1227, 1
      %vm1230 = vcmp.eq.s32.totalorder %v1228, 1
      %v1231 = vsel %vm1229, %v157, -3e+38
      %v1232 = vsel %vm1230, %v158, -3e+38
      %v1233 = vsel %vm1229, %v159, -3e+38
      %v1234 = vsel %vm1230, %v160, -3e+38
      %v1235 = vsel %vm1229, %v161, -3e+38
      %v1236 = vsel %vm1230, %v162, -3e+38
      %v1237 = vsel %vm1229, %v163, -3e+38
      %v1238 = vsel %vm1230, %v164, -3e+38
      %v1239 = vsel %vm1229, %v165, -3e+38
      %v1240 = vsel %vm1230, %v166, -3e+38
      %v1241 = vsel %vm1229, %v167, -3e+38
      %v1242 = vsel %vm1230, %v168, -3e+38
      %v1243 = vsel %vm1229, %v169, -3e+38
      %v1244 = vsel %vm1230, %v170, -3e+38
      %v1245 = vsel %vm1229, %v171, -3e+38
      %v1246 = vsel %vm1230, %v172, -3e+38
      %v1247 = vsel %vm1229, %v173, -3e+38
      %v1248 = vsel %vm1230, %v174, -3e+38
      %v1249 = vsel %vm1229, %v175, -3e+38
      %v1250 = vsel %vm1230, %v176, -3e+38
      %v1251 = vsel %vm1229, %v177, -3e+38
      %v1252 = vsel %vm1230, %v178, -3e+38
      %v1253 = vsel %vm1229, %v179, -3e+38
      %v1254 = vsel %vm1230, %v180, -3e+38
      %v1255 = vsel %vm1229, %v181, -3e+38
      %v1256 = vsel %vm1230, %v182, -3e+38
      %v1257 = vsel %vm1229, %v183, -3e+38
      %v1258 = vsel %vm1230, %v184, -3e+38
      %v1259 = vsel %vm1229, %v185, -3e+38
      %v1260 = vsel %vm1230, %v186, -3e+38
      %v1261 = vsel %vm1229, %v187, -3e+38
      %v1262 = vsel %vm1230, %v188, -3e+38
      %v1263 = vsel %vm239, %v1231, -inf
      %v1264 = vsel %vm239, %v1232, -inf
      %v1265 = vmax.f32 %v1263, %v1264
      %v1266 = vrot.slane %v1265, 4
      %v1267 = vmax.f32 %v1265, %v1266
      %v1268 = vrot.slane %v1267, 2
      %v1269 = vmax.f32 %v1267, %v1268
      %v1270 = vrot.slane %v1269, 1
      %v1271 = vmax.f32 %v1269, %v1270
      %v1272 = vsel %vm239, %v1233, -inf
      %v1273 = vsel %vm239, %v1234, -inf
      %v1274 = vmax.f32 %v1272, %v1273
      %v1275 = vrot.slane %v1274, 4
      %v1276 = vmax.f32 %v1274, %v1275
      %v1277 = vrot.slane %v1276, 2
      %v1278 = vmax.f32 %v1276, %v1277
      %v1279 = vrot.slane %v1278, 1
      %v1280 = vmax.f32 %v1278, %v1279
      %v1281 = vsel %vm239, %v1235, -inf
      %v1282 = vsel %vm239, %v1236, -inf
      %v1283 = vmax.f32 %v1281, %v1282
      %v1284 = vrot.slane %v1283, 4
      %v1285 = vmax.f32 %v1283, %v1284
      %v1286 = vrot.slane %v1285, 2
      %v1287 = vmax.f32 %v1285, %v1286
      %v1288 = vrot.slane %v1287, 1
      %v1289 = vmax.f32 %v1287, %v1288
      %v1290 = vsel %vm239, %v1237, -inf
      %v1291 = vsel %vm239, %v1238, -inf
      %v1292 = vmax.f32 %v1290, %v1291
      %v1293 = vrot.slane %v1292, 4
      %v1294 = vmax.f32 %v1292, %v1293
      %v1295 = vrot.slane %v1294, 2
      %v1296 = vmax.f32 %v1294, %v1295
      %v1297 = vrot.slane %v1296, 1
      %v1298 = vmax.f32 %v1296, %v1297
      %v1299 = vsel %vm239, %v1239, -inf
      %v1300 = vsel %vm239, %v1240, -inf
      %v1301 = vmax.f32 %v1299, %v1300
      %v1302 = vrot.slane %v1301, 4
      %v1303 = vmax.f32 %v1301, %v1302
      %v1304 = vrot.slane %v1303, 2
      %v1305 = vmax.f32 %v1303, %v1304
      %v1306 = vrot.slane %v1305, 1
      %v1307 = vmax.f32 %v1305, %v1306
      %v1308 = vsel %vm239, %v1241, -inf
      %v1309 = vsel %vm239, %v1242, -inf
      %v1310 = vmax.f32 %v1308, %v1309
      %v1311 = vrot.slane %v1310, 4
      %v1312 = vmax.f32 %v1310, %v1311
      %v1313 = vrot.slane %v1312, 2
      %v1314 = vmax.f32 %v1312, %v1313
      %v1315 = vrot.slane %v1314, 1
      %v1316 = vmax.f32 %v1314, %v1315
      %v1317 = vsel %vm239, %v1243, -inf
      %v1318 = vsel %vm239, %v1244, -inf
      %v1319 = vmax.f32 %v1317, %v1318
      %v1320 = vrot.slane %v1319, 4
      %v1321 = vmax.f32 %v1319, %v1320
      %v1322 = vrot.slane %v1321, 2
      %v1323 = vmax.f32 %v1321, %v1322
      %v1324 = vrot.slane %v1323, 1
      %v1325 = vmax.f32 %v1323, %v1324
      %v1326 = vsel %vm239, %v1245, -inf
      %v1327 = vsel %vm239, %v1246, -inf
      %v1328 = vmax.f32 %v1326, %v1327
      %v1329 = vrot.slane %v1328, 4
      %v1330 = vmax.f32 %v1328, %v1329
      %v1331 = vrot.slane %v1330, 2
      %v1332 = vmax.f32 %v1330, %v1331
      %v1333 = vrot.slane %v1332, 1
      %v1334 = vmax.f32 %v1332, %v1333
      %v1335 = vsel %vm239, %v1247, -inf
      %v1336 = vsel %vm239, %v1248, -inf
      %v1337 = vmax.f32 %v1335, %v1336
      %v1338 = vrot.slane %v1337, 4
      %v1339 = vmax.f32 %v1337, %v1338
      %v1340 = vrot.slane %v1339, 2
      %v1341 = vmax.f32 %v1339, %v1340
      %v1342 = vrot.slane %v1341, 1
      %v1343 = vmax.f32 %v1341, %v1342
      %v1344 = vsel %vm239, %v1249, -inf
      %v1345 = vsel %vm239, %v1250, -inf
      %v1346 = vmax.f32 %v1344, %v1345
      %v1347 = vrot.slane %v1346, 4
      %v1348 = vmax.f32 %v1346, %v1347
      %v1349 = vrot.slane %v1348, 2
      %v1350 = vmax.f32 %v1348, %v1349
      %v1351 = vrot.slane %v1350, 1
      %v1352 = vmax.f32 %v1350, %v1351
      %v1353 = vsel %vm239, %v1251, -inf
      %v1354 = vsel %vm239, %v1252, -inf
      %v1355 = vmax.f32 %v1353, %v1354
      %v1356 = vrot.slane %v1355, 4
      %v1357 = vmax.f32 %v1355, %v1356
      %v1358 = vrot.slane %v1357, 2
      %v1359 = vmax.f32 %v1357, %v1358
      %v1360 = vrot.slane %v1359, 1
      %v1361 = vmax.f32 %v1359, %v1360
      %v1362 = vsel %vm239, %v1253, -inf
      %v1363 = vsel %vm239, %v1254, -inf
      %v1364 = vmax.f32 %v1362, %v1363
      %v1365 = vrot.slane %v1364, 4
      %v1366 = vmax.f32 %v1364, %v1365
      %v1367 = vrot.slane %v1366, 2
      %v1368 = vmax.f32 %v1366, %v1367
      %v1369 = vrot.slane %v1368, 1
      %v1370 = vmax.f32 %v1368, %v1369
      %v1371 = vsel %vm239, %v1255, -inf
      %v1372 = vsel %vm239, %v1256, -inf
      %v1373 = vmax.f32 %v1371, %v1372
      %v1374 = vrot.slane %v1373, 4
      %v1375 = vmax.f32 %v1373, %v1374
      %v1376 = vrot.slane %v1375, 2
      %v1377 = vmax.f32 %v1375, %v1376
      %v1378 = vrot.slane %v1377, 1
      %v1379 = vmax.f32 %v1377, %v1378
      %v1380 = vsel %vm239, %v1257, -inf
      %v1381 = vsel %vm239, %v1258, -inf
      %v1382 = vmax.f32 %v1380, %v1381
      %v1383 = vrot.slane %v1382, 4
      %v1384 = vmax.f32 %v1382, %v1383
      %v1385 = vrot.slane %v1384, 2
      %v1386 = vmax.f32 %v1384, %v1385
      %v1387 = vrot.slane %v1386, 1
      %v1388 = vmax.f32 %v1386, %v1387
      %v1389 = vsel %vm239, %v1259, -inf
      %v1390 = vsel %vm239, %v1260, -inf
      %v1391 = vmax.f32 %v1389, %v1390
      %v1392 = vrot.slane %v1391, 4
      %v1393 = vmax.f32 %v1391, %v1392
      %v1394 = vrot.slane %v1393, 2
      %v1395 = vmax.f32 %v1393, %v1394
      %v1396 = vrot.slane %v1395, 1
      %v1397 = vmax.f32 %v1395, %v1396
      %v1398 = vsel %vm239, %v1261, -inf
      %v1399 = vsel %vm239, %v1262, -inf
      %v1400 = vmax.f32 %v1398, %v1399
      %v1401 = vrot.slane %v1400, 4
      %v1402 = vmax.f32 %v1400, %v1401
      %v1403 = vrot.slane %v1402, 2
      %v1404 = vmax.f32 %v1402, %v1403
      %v1405 = vrot.slane %v1404, 1
      %v1406 = vmax.f32 %v1404, %v1405
      %s1407 = sld [smem:[#allocation4 + %s192]]
      %s1408 = sld [smem:[#allocation5 + %s192]]
      %v1409 = vstv %s1407
      %vm1410 = vcmp.ge.s32.totalorder %v190, %v1409
      %vm1411 = vcmp.ge.s32.totalorder %v191, %v1409
      %v1412 = vstv %s1408
      %vm1413 = vcmp.lt.s32.totalorder %v190, %v1412
      %vm1414 = vcmp.lt.s32.totalorder %v191, %v1412
      %vm1415 = vmand %vm1410, %vm1413
      %vm1416 = vmand %vm1411, %vm1414
      %v1417 = vsel %vm1415, 1, 0
      %v1418 = vsel %vm1416, 1, 0
      %vm1419 = vcmp.eq.s32.totalorder %v1417, 1
      %vm1420 = vcmp.eq.s32.totalorder %v1418, 1
      %v1437 = vsel %vm414, %v1280, %v1271
      %v1438 = vsel %vm416, %v1289, %v1437
      %v1439 = vsel %vm418, %v1298, %v1438
      %v1440 = vsel %vm420, %v1307, %v1439
      %v1441 = vsel %vm422, %v1316, %v1440
      %v1442 = vsel %vm424, %v1325, %v1441
      %v1443 = vsel %vm426, %v1334, %v1442
      %v1444 = vsel %vm414, %v1352, %v1343
      %v1445 = vsel %vm416, %v1361, %v1444
      %v1446 = vsel %vm418, %v1370, %v1445
      %v1447 = vsel %vm420, %v1379, %v1446
      %v1448 = vsel %vm422, %v1388, %v1447
      %v1449 = vsel %vm424, %v1397, %v1448
      %v1450 = vsel %vm426, %v1406, %v1449
      %v1453 = vsel %vm1419, %v1443, -3e+38
      %v1454 = vsel %vm1420, %v1450, -3e+38
      %v1455 = vsel %vm239, %v1453, -inf
      %v1456 = vsel %vm239, %v1454, -inf
      %v1457 = vmax.f32 %v1455, %v1456
      %v1458 = vrot.slane %v1457, 4
      %v1459 = vmax.f32 %v1457, %v1458
      %v1460 = vrot.slane %v1459, 2
      %v1461 = vmax.f32 %v1459, %v1460
      %v1462 = vrot.slane %v1461, 1
      %v1463 = vmax.f32 %v1461, %v1462
      %vm1464 = vcmp.lt.f32.partialorder %v1463, -1e+37
      %v1465 = vsel %vm1464, 0.0, %v1463
      %s1466 = sld [smem:[#allocation4 + %s450]]
      %s1467 = sld [smem:[#allocation5 + %s450]]
      %v1468 = vstv %s1466
      %vm1469 = vcmp.ge.s32.totalorder %v190, %v1468
      %vm1470 = vcmp.ge.s32.totalorder %v191, %v1468
      %v1471 = vstv %s1467
      %vm1472 = vcmp.lt.s32.totalorder %v190, %v1471
      %vm1473 = vcmp.lt.s32.totalorder %v191, %v1471
      %vm1474 = vmand %vm1469, %vm1472
      %vm1475 = vmand %vm1470, %vm1473
      %v1476 = vsel %vm1474, 1, 0
      %v1477 = vsel %vm1475, 1, 0
      %vm1478 = vcmp.eq.s32.totalorder %v1476, 1
      %vm1479 = vcmp.eq.s32.totalorder %v1477, 1
      %v1480 = vsel %vm1478, %v1443, -3e+38
      %v1481 = vsel %vm1479, %v1450, -3e+38
      %v1482 = vsel %vm239, %v1480, -inf
      %v1483 = vsel %vm239, %v1481, -inf
      %v1484 = vmax.f32 %v1482, %v1483
      %v1485 = vrot.slane %v1484, 4
      %v1486 = vmax.f32 %v1484, %v1485
      %v1487 = vrot.slane %v1486, 2
      %v1488 = vmax.f32 %v1486, %v1487
      %v1489 = vrot.slane %v1488, 1
      %v1490 = vmax.f32 %v1488, %v1489
      %vm1491 = vcmp.lt.f32.partialorder %v1490, -1e+37
      %v1492 = vsel %vm1491, 0.0, %v1490
      %s1493 = sld [smem:[#allocation4 + %s478]]
      %s1494 = sld [smem:[#allocation5 + %s478]]
      %v1495 = vstv %s1493
      %vm1496 = vcmp.ge.s32.totalorder %v190, %v1495
      %vm1497 = vcmp.ge.s32.totalorder %v191, %v1495
      %v1498 = vstv %s1494
      %vm1499 = vcmp.lt.s32.totalorder %v190, %v1498
      %vm1500 = vcmp.lt.s32.totalorder %v191, %v1498
      %vm1501 = vmand %vm1496, %vm1499
      %vm1502 = vmand %vm1497, %vm1500
      %v1503 = vsel %vm1501, 1, 0
      %v1504 = vsel %vm1502, 1, 0
      %vm1505 = vcmp.eq.s32.totalorder %v1503, 1
      %vm1506 = vcmp.eq.s32.totalorder %v1504, 1
      %v1507 = vsel %vm1505, %v1443, -3e+38
      %v1508 = vsel %vm1506, %v1450, -3e+38
      %v1509 = vsel %vm239, %v1507, -inf
      %v1510 = vsel %vm239, %v1508, -inf
      %v1511 = vmax.f32 %v1509, %v1510
      %v1512 = vrot.slane %v1511, 4
      %v1513 = vmax.f32 %v1511, %v1512
      %v1514 = vrot.slane %v1513, 2
      %v1515 = vmax.f32 %v1513, %v1514
      %v1516 = vrot.slane %v1515, 1
      %v1517 = vmax.f32 %v1515, %v1516
      %vm1518 = vcmp.lt.f32.partialorder %v1517, -1e+37
      %v1519 = vsel %vm1518, 0.0, %v1517
      %s1520 = sld [smem:[#allocation4 + %s506]]
      %s1521 = sld [smem:[#allocation5 + %s506]]
      %v1522 = vstv %s1520
      %vm1523 = vcmp.ge.s32.totalorder %v190, %v1522
      %vm1524 = vcmp.ge.s32.totalorder %v191, %v1522
      %v1525 = vstv %s1521
      %vm1526 = vcmp.lt.s32.totalorder %v190, %v1525
      %vm1527 = vcmp.lt.s32.totalorder %v191, %v1525
      %vm1528 = vmand %vm1523, %vm1526
      %vm1529 = vmand %vm1524, %vm1527
      %v1530 = vsel %vm1528, 1, 0
      %v1531 = vsel %vm1529, 1, 0
      %vm1532 = vcmp.eq.s32.totalorder %v1530, 1
      %vm1533 = vcmp.eq.s32.totalorder %v1531, 1
      %v1534 = vsel %vm1532, %v1443, -3e+38
      %v1535 = vsel %vm1533, %v1450, -3e+38
      %v1536 = vsel %vm239, %v1534, -inf
      %v1537 = vsel %vm239, %v1535, -inf
      %v1538 = vmax.f32 %v1536, %v1537
      %v1539 = vrot.slane %v1538, 4
      %v1540 = vmax.f32 %v1538, %v1539
      %v1541 = vrot.slane %v1540, 2
      %v1542 = vmax.f32 %v1540, %v1541
      %v1543 = vrot.slane %v1542, 1
      %v1544 = vmax.f32 %v1542, %v1543
      %vm1545 = vcmp.lt.f32.partialorder %v1544, -1e+37
      %v1546 = vsel %vm1545, 0.0, %v1544
      %v1547 = vsel %vm534, %v1465, %v1492
      %v1548 = vsel %vm536, %v1547, %v1519
      %v1549 = vsel %vm538, %v1548, %v1546
      %v1550 = vpack.c.bf16 %v1549, %v1549
      %v1552 = vrot.slane %v1550, 6
      %1554 = vst.msk [vmem:[%s156 + $0x4] sm:$0xc] %vm880, %v1552
      %p1555 = scmp.lt.s32.totalorder %s45, 7
      %s1556 = scalar_select %p1555, %s45, 7
      %s1557 = smul.addr %s1556, 2
      %s1558 = smul.addr %s1557, 4
      %s1559 = scalar_lea.vmem %s6, %s1558
      // Predicated region
      $region25: #{tpu_custom_call.1} parent=23 // pred_check
        %p1560 = pneg %p91
      $region26: #{tpu_custom_call.1} parent=23 // pred_check_branch
        %1562 = sbr.rel (%p1560) target = $region28
      $region27: #{tpu_custom_call.1} parent=23 // pred_region
        _
      $region28: #{tpu_custom_call.1} parent=23 // pred_fallthru
        _
    $region24: #{tpu_custom_call.1} parent=5 // pred_fallthru
      _
    %p1563 = scmp.le.s32.totalorder 2, %s40
    // Predicated region
    $region29: #{tpu_custom_call.1} parent=5 // pred_check
      %p1564 = pneg %p1563
    $region30: #{tpu_custom_call.1} parent=5 // pred_check_branch
      %1566 = sbr.rel (%p1564) target = $region32
    $region31: #{tpu_custom_call.1} parent=5 // pred_region
      %s1567 = ssub.s32 %s40, 2
      // Predicated region
      $region33: #{tpu_custom_call.1} parent=31 // pred_check
        %p1568 = pneg %p97
      $region34: #{tpu_custom_call.1} parent=31 // pred_check_branch
        %1570 = sbr.rel (%p1568) target = $region36
      $region35: #{tpu_custom_call.1} parent=31 // pred_region
        %p1571 = scmp.lt.s32.totalorder %s46, 7
        %s1572 = scalar_select %p1571, %s46, 7
        %s1573 = smul.addr %s1572, 2
        %s1574 = smul.addr %s1573, 4
        %s1575 = scalar_lea.vmem %s6, %s1574
      $region36: #{tpu_custom_call.1} parent=31 // pred_fallthru
        _
    $region32: #{tpu_custom_call.1} parent=5 // pred_fallthru
      _
  $region6: #{tpu_custom_call.1} parent=0 // loop_footer
    %s44 = sadd.s32 1, %s40
  $region7: #{tpu_custom_call.1} parent=0 // loop_footer_branch
    %39 = sbr.rel target = $region3
  $region8: #{tpu_custom_call.1} parent=0 // loop_exit
    _

</llo_original>
